<compile_context>
chip_gen: v7x
topology: tpu7x:2x2x1
jax: 0.10.0
libtpu: 0.0.40
codegen_flags: <defaults>
</compile_context>

<pallas_src>
import functools

import jax
import jax.numpy as jnp
from jax.experimental import pallas as pl
from jax.experimental.pallas import tpu as pltpu


# ----------------------------------------------------------------------------
# Fused kernel: one grid step == one batch element
# ----------------------------------------------------------------------------
def _fused_attention_kernel(x_ref, wqkv_ref, bqkv_ref, wp_ref, bp_ref,
                            o_ref, qkv_buf, ctx_buf, *, num_heads):
    _, N, C = x_ref.shape
    H = num_heads
    hd = C // H

    # ---- QKV projection: ONE (N, C) x (C, 3C) bf16 MXU matmul, f32 accumulate. ----
    x_bf = x_ref[0].astype(jnp.bfloat16)                                   # (N, C)
    qkv = jnp.dot(x_bf, wqkv_ref[...],
                  preferred_element_type=jnp.float32) + bqkv_ref[...]      # (N, 3C) f32
    qkv_buf[...] = qkv          # stage in VMEM so per-head views are cheap ref loads

    # ---- Per-head scaled dot-product attention (scale pre-folded into Wq/bq). ----
    # hd=8 per-head matmuls are intrinsic; softmax math stays in f32.
    for h in range(H):
        q_h = qkv_buf[:, h * hd:(h + 1) * hd].astype(jnp.bfloat16)             # (N, hd)
        k_h = qkv_buf[:, C + h * hd:C + (h + 1) * hd].astype(jnp.bfloat16)     # (N, hd)
        v_h = qkv_buf[:, 2 * C + h * hd:2 * C + (h + 1) * hd].astype(jnp.bfloat16)

        s = jnp.einsum("qd,kd->qk", q_h, k_h,
                       preferred_element_type=jnp.float32)                 # (N, N) f32
        m = jnp.max(s, axis=-1, keepdims=True)
        p = jnp.exp(s - m)                                                  # f32 softmax
        l = jnp.sum(p, axis=-1, keepdims=True)
        ctx_h = jnp.dot(p.astype(jnp.bfloat16), v_h,
                        preferred_element_type=jnp.float32)                 # (N, hd) f32
        # Normalize the small (N, hd) context (exact reciprocal), not the (N, N) probs.
        ctx_buf[:, h * hd:(h + 1) * hd] = ctx_h * pl.reciprocal(l, approx=False)

    # ---- Output projection: head-merge folded into ONE (N, C) x (C, C) matmul. ----
    out = jnp.dot(ctx_buf[...].astype(jnp.bfloat16), wp_ref[...],
                  preferred_element_type=jnp.float32) + bp_ref[...]
    o_ref[0] = out.astype(o_ref.dtype)


# ----------------------------------------------------------------------------
# One-time parameter preparation (outside the hot path)
# ----------------------------------------------------------------------------
def prepare_params(params, num_heads):
    """Torch-layout Linear params -> fused, bf16, kernel-friendly layouts."""
    w_qkv, b_qkv = params["w_qkv"], params["b_qkv"]      # (3C, C), (3C,)
    w_proj, b_proj = params["w_proj"], params["b_proj"]  # (C, C),  (C,)
    C = w_qkv.shape[1]
    hd = C // num_heads
    scale = hd ** (-0.5)

    w = jnp.asarray(w_qkv, jnp.float32).T                # (C, 3C): col = i3*C + h*hd + d
    b = jnp.asarray(b_qkv, jnp.float32).reshape(1, 3 * C)
    # Fold the softmax scale into the Q slice of the fused weight/bias.
    q_scale = jnp.concatenate([jnp.full((C,), scale, jnp.float32),
                               jnp.ones((2 * C,), jnp.float32)])
    w = w * q_scale[None, :]
    b = b * q_scale[None, :]

    return dict(
        w_qkv=w.astype(jnp.bfloat16),                              # (C, 3C) bf16
        b_qkv=b,                                                   # (1, 3C) f32
        w_proj=jnp.asarray(w_proj, jnp.float32).T.astype(jnp.bfloat16),  # (C, C) bf16
        b_proj=jnp.asarray(b_proj, jnp.float32).reshape(1, C),     # (1, C) f32
        num_heads=num_heads,
    )


# ----------------------------------------------------------------------------
# Module wrapper: mirrors Attention.forward
# ----------------------------------------------------------------------------
def attention_forward(x, kparams):
    B, N, C = x.shape
    H = kparams["num_heads"]

    const2 = lambda b: (0, 0)
    grid_spec = pltpu.PrefetchScalarGridSpec(
        num_scalar_prefetch=0,
        grid=(B,),
        in_specs=[
            pl.BlockSpec((1, N, C), lambda b: (b, 0, 0)),   # x (per-batch block)
            pl.BlockSpec((C, 3 * C), const2),               # fused W_qkv (bf16)
            pl.BlockSpec((1, 3 * C), const2),               # fused b_qkv (f32)
            pl.BlockSpec((C, C), const2),                   # W_proj^T (bf16)
            pl.BlockSpec((1, C), const2),                   # b_proj (f32)
        ],
        out_specs=pl.BlockSpec((1, N, C), lambda b: (b, 0, 0)),
        scratch_shapes=[
            pltpu.VMEM((N, 3 * C), jnp.float32),            # qkv staging slab
            pltpu.VMEM((N, C), jnp.float32),                # merged per-head contexts
        ],
    )

    return pl.pallas_call(
        functools.partial(_fused_attention_kernel, num_heads=H),
        out_shape=jax.ShapeDtypeStruct((B, N, C), x.dtype),
        grid_spec=grid_spec,
        compiler_params=pltpu.CompilerParams(
            dimension_semantics=("parallel",)),
    )(x, kparams["w_qkv"], kparams["b_qkv"], kparams["w_proj"], kparams["b_proj"])


# ----------------------------------------------------------------------------
# References for correctness checks
# ----------------------------------------------------------------------------
def attention_ref_mixed(x, kparams):
    """Pure-JAX replica of the kernel's mixed-precision math (bf16 MXU operands,
    f32 accumulation/softmax) -> allows a TIGHT tolerance that catches real bugs."""
    H = kparams["num_heads"]
    B, N, C = x.shape
    hd = C // H
    qkv = jnp.einsum("bnc,cf->bnf", x.astype(jnp.bfloat16), kparams["w_qkv"],
                     preferred_element_type=jnp.float32) + kparams["b_qkv"]

    def heads(t):  # (B, N, C) -> (B, H, N, hd) bf16
        return t.reshape(B, N, H, hd).transpose(0, 2, 1, 3).astype(jnp.bfloat16)

    q, k, v = heads(qkv[..., :C]), heads(qkv[..., C:2 * C]), heads(qkv[..., 2 * C:])
    s = jnp.einsum("bhqd,bhkd->bhqk", q, k, preferred_element_type=jnp.float32)
    p = jnp.exp(s - jnp.max(s, axis=-1, keepdims=True))
    l = jnp.sum(p, axis=-1, keepdims=True)
    ctx = jnp.einsum("bhqk,bhkd->bhqd", p.astype(jnp.bfloat16), v,
                     preferred_element_type=jnp.float32) * (1.0 / l)
    ctx = ctx.transpose(0, 2, 1, 3).reshape(B, N, C)
    return jnp.einsum("bnc,cf->bnf", ctx.astype(jnp.bfloat16), kparams["w_proj"],
                      preferred_element_type=jnp.float32) + kparams["b_proj"]


def attention_ref_f32(x, params, num_heads):
    """Exact f32 torch-semantics reference."""
    B, N, C = x.shape
    hd = C // num_heads
    scale = hd ** (-0.5)
    qkv = x @ params["w_qkv"].T + params["b_qkv"]
    qkv = qkv.reshape(B, N, 3, num_heads, hd).transpose(2, 0, 3, 1, 4)
    q, k, v = qkv[0], qkv[1], qkv[2]
    attn = jnp.einsum("bhqd,bhkd->bhqk", q, k) * scale
    attn = jax.nn.softmax(attn, axis=-1)
    out = jnp.einsum("bhqk,bhkd->bhqd", attn, v)
    out = out.transpose(0, 2, 1, 3).reshape(B, N, C)
    return out @ params["w_proj"].T + params["b_proj"]


if __name__ == "__main__":
    # Shapes consistent with the module: B=2, N=16, dim=64, num_heads=8 (head_dim=8)
    B, N, C = 2, 16, 64
    num_heads = 8

    key = jax.random.PRNGKey(0)
    kx, k1, k2, k3, k4 = jax.random.split(key, 5)

    x = jax.random.normal(kx, (B, N, C), dtype=jnp.float32)
    params = {
        "w_qkv":  jax.random.normal(k1, (3 * C, C), dtype=jnp.float32) * 0.05,
        "b_qkv":  jax.random.normal(k2, (3 * C,),   dtype=jnp.float32) * 0.05,
        "w_proj": jax.random.normal(k3, (C, C),     dtype=jnp.float32) * 0.05,
        "b_proj": jax.random.normal(k4, (C,),       dtype=jnp.float32) * 0.05,
    }

    kparams = prepare_params(params, num_heads)          # one-time layout/bf16 prep

    out = jax.block_until_ready(attention_forward(x, kparams))
    assert out.shape == (B, N, C)

    # (1) Tight check vs a reference using the SAME bf16 operands -- not masked by
    #     bf16 rounding, so real kernel regressions are caught.
    ref_m = attention_ref_mixed(x, kparams)
    err_m = float(jnp.max(jnp.abs(out - ref_m)))
    assert jnp.allclose(out, ref_m, atol=1e-3, rtol=1e-3), f"mixed-ref mismatch: {err_m}"

    # (2) Looser check vs the exact f32 torch-semantics reference; slack is solely the
    #     bf16 MXU operands (softmax + normalization are exact f32).
    ref_f = attention_ref_f32(x, params, num_heads)
    err_f = float(jnp.max(jnp.abs(out - ref_f)))
    assert jnp.allclose(out, ref_f, atol=2e-2, rtol=2e-2), f"f32-ref mismatch: {err_f}"

    print("KERNEL_OK")
</pallas_src>

<mosaic_0001>
module attributes {stable_mosaic.version = 11 : i64} {
  func.func @_fused_attention_kernel(%arg0: i32, %arg1: memref<1x16x64xf32, #tpu.memory_space<vmem>>, %arg2: memref<64x192xbf16, #tpu.memory_space<vmem>>, %arg3: memref<1x192xf32, #tpu.memory_space<vmem>>, %arg4: memref<64x64xbf16, #tpu.memory_space<vmem>>, %arg5: memref<1x64xf32, #tpu.memory_space<vmem>>, %arg6: memref<1x16x64xf32, #tpu.memory_space<vmem>>, %arg7: memref<16x192xf32, #tpu.memory_space<vmem>>, %arg8: memref<16x64xf32, #tpu.memory_space<vmem>>) attributes {dimension_semantics = [#tpu.dimension_semantics<parallel>], iteration_bounds = array<i64: 2>, scalar_prefetch = 0 : i64, scratch_operands = 2 : i64, tpu.core_type = #tpu.core_type<tc>, window_params = [{transform_indices = @transform_0, window_bounds = array<i64: 1, 16, 64>}, {pipeline_mode = #tpu.pipeline_mode<synchronous>, transform_indices = @transform_1, window_bounds = array<i64: 64, 192>}, {pipeline_mode = #tpu.pipeline_mode<synchronous>, transform_indices = @transform_2, window_bounds = array<i64: 1, 192>}, {pipeline_mode = #tpu.pipeline_mode<synchronous>, transform_indices = @transform_3, window_bounds = array<i64: 64, 64>}, {pipeline_mode = #tpu.pipeline_mode<synchronous>, transform_indices = @transform_4, window_bounds = array<i64: 1, 64>}, {transform_indices = @transform_5, window_bounds = array<i64: 1, 16, 64>}]} {
    %c0 = arith.constant 0 : index
    %c0_0 = arith.constant 0 : index
    %c0_1 = arith.constant 0 : index
    %0 = vector.load %arg1[%c0, %c0_0, %c0_1] : memref<1x16x64xf32, #tpu.memory_space<vmem>>, vector<1x16x64xf32>
    %1 = vector.shape_cast %0 : vector<1x16x64xf32> to vector<16x64xf32>
    %2 = arith.truncf %1 : vector<16x64xf32> to vector<16x64xbf16>
    %c0_2 = arith.constant 0 : index
    %c0_3 = arith.constant 0 : index
    %3 = vector.load %arg2[%c0_2, %c0_3] : memref<64x192xbf16, #tpu.memory_space<vmem>>, vector<64x192xbf16>
    %cst = arith.constant dense<0.000000e+00> : vector<16x192xf32>
    %4 = tpu.matmul %2, %3, %cst {dimension_numbers = #tpu.dot_dimension_numbers<[1], [0], [0], [1], [0, 0, 1, 1], [], []>} : vector<16x64xbf16>, vector<64x192xbf16>, vector<16x192xf32> -> vector<16x192xf32>
    %c0_4 = arith.constant 0 : index
    %c0_5 = arith.constant 0 : index
    %5 = vector.load %arg3[%c0_4, %c0_5] : memref<1x192xf32, #tpu.memory_space<vmem>>, vector<1x192xf32>
    %6 = vector.broadcast %5 : vector<1x192xf32> to vector<16x192xf32>
    %7 = arith.addf %4, %6 : vector<16x192xf32>
    %c0_6 = arith.constant 0 : index
    %c0_7 = arith.constant 0 : index
    %8 = vector.load %arg7[%c0_6, %c0_7] : memref<16x192xf32, #tpu.memory_space<vmem>>, vector<16x192xf32>
    tpu.vector_store %arg7[%c0_6, %c0_7], %7 {strides = array<i32>} : memref<16x192xf32, #tpu.memory_space<vmem>>, vector<16x192xf32>,
    %c0_8 = arith.constant 0 : index
    %c0_9 = arith.constant 0 : index
    %9 = vector.load %arg7[%c0_8, %c0_9] : memref<16x192xf32, #tpu.memory_space<vmem>>, vector<16x8xf32>
    %10 = arith.truncf %9 : vector<16x8xf32> to vector<16x8xbf16>
    %c0_10 = arith.constant 0 : index
    %c64 = arith.constant 64 : index
    %11 = vector.load %arg7[%c0_10, %c64] : memref<16x192xf32, #tpu.memory_space<vmem>>, vector<16x8xf32>
    %12 = arith.truncf %11 : vector<16x8xf32> to vector<16x8xbf16>
    %c0_11 = arith.constant 0 : index
    %c128 = arith.constant 128 : index
    %13 = vector.load %arg7[%c0_11, %c128] : memref<16x192xf32, #tpu.memory_space<vmem>>, vector<16x8xf32>
    %14 = arith.truncf %13 : vector<16x8xf32> to vector<16x8xbf16>
    "tpu.trace_start"() <{level = 10 : i32, message = "qd,kd->qk"}> : () -> ()
    %cst_12 = arith.constant dense<0.000000e+00> : vector<16x16xf32>
    %15 = tpu.matmul %10, %12, %cst_12 {dimension_numbers = #tpu.dot_dimension_numbers<[1], [1], [0], [0], [0, 0, 1, 0], [], []>} : vector<16x8xbf16>, vector<16x8xbf16>, vector<16x16xf32> -> vector<16x16xf32>
    "tpu.trace_stop"() : () -> ()
    %cst_13 = arith.constant dense<0xFF800000> : vector<16xf32>
    %16 = vector.multi_reduction <maximumf>, %15, %cst_13 [1] : vector<16x16xf32> to vector<16xf32>
    %17 = vector.shape_cast %16 : vector<16xf32> to vector<16x1xf32>
    %18 = vector.broadcast %17 : vector<16x1xf32> to vector<16x16xf32>
    %19 = arith.subf %15, %18 : vector<16x16xf32>
    %20 = math.exp %19 : vector<16x16xf32>
    %cst_14 = arith.constant dense<0.000000e+00> : vector<16xf32>
    %21 = vector.multi_reduction <add>, %20, %cst_14 [1] : vector<16x16xf32> to vector<16xf32>
    %22 = vector.shape_cast %21 : vector<16xf32> to vector<16x1xf32>
    %23 = arith.truncf %20 : vector<16x16xf32> to vector<16x16xbf16>
    %cst_15 = arith.constant dense<0.000000e+00> : vector<16x8xf32>
    %24 = tpu.matmul %23, %14, %cst_15 {dimension_numbers = #tpu.dot_dimension_numbers<[1], [0], [0], [1], [0, 0, 1, 1], [], []>} : vector<16x16xbf16>, vector<16x8xbf16>, vector<16x8xf32> -> vector<16x8xf32>
    %25 = tpu.reciprocal %22 : vector<16x1xf32> -> vector<16x1xf32>
    %26 = vector.broadcast %25 : vector<16x1xf32> to vector<16x8xf32>
    %27 = arith.mulf %24, %26 : vector<16x8xf32>
    %c0_16 = arith.constant 0 : index
    %c0_17 = arith.constant 0 : index
    %28 = vector.load %arg8[%c0_16, %c0_17] : memref<16x64xf32, #tpu.memory_space<vmem>>, vector<16x8xf32>
    tpu.vector_store %arg8[%c0_16, %c0_17], %27 {strides = array<i32>} : memref<16x64xf32, #tpu.memory_space<vmem>>, vector<16x8xf32>,
    %c0_18 = arith.constant 0 : index
    %c8 = arith.constant 8 : index
    %29 = vector.load %arg7[%c0_18, %c8] : memref<16x192xf32, #tpu.memory_space<vmem>>, vector<16x8xf32>
    %30 = arith.truncf %29 : vector<16x8xf32> to vector<16x8xbf16>
    %c0_19 = arith.constant 0 : index
    %c72 = arith.constant 72 : index
    %31 = vector.load %arg7[%c0_19, %c72] : memref<16x192xf32, #tpu.memory_space<vmem>>, vector<16x8xf32>
    %32 = arith.truncf %31 : vector<16x8xf32> to vector<16x8xbf16>
    %c0_20 = arith.constant 0 : index
    %c136 = arith.constant 136 : index
    %33 = vector.load %arg7[%c0_20, %c136] : memref<16x192xf32, #tpu.memory_space<vmem>>, vector<16x8xf32>
    %34 = arith.truncf %33 : vector<16x8xf32> to vector<16x8xbf16>
    "tpu.trace_start"() <{level = 10 : i32, message = "qd,kd->qk"}> : () -> ()
    %cst_21 = arith.constant dense<0.000000e+00> : vector<16x16xf32>
    %35 = tpu.matmul %30, %32, %cst_21 {dimension_numbers = #tpu.dot_dimension_numbers<[1], [1], [0], [0], [0, 0, 1, 0], [], []>} : vector<16x8xbf16>, vector<16x8xbf16>, vector<16x16xf32> -> vector<16x16xf32>
    "tpu.trace_stop"() : () -> ()
    %cst_22 = arith.constant dense<0xFF800000> : vector<16xf32>
    %36 = vector.multi_reduction <maximumf>, %35, %cst_22 [1] : vector<16x16xf32> to vector<16xf32>
    %37 = vector.shape_cast %36 : vector<16xf32> to vector<16x1xf32>
    %38 = vector.broadcast %37 : vector<16x1xf32> to vector<16x16xf32>
    %39 = arith.subf %35, %38 : vector<16x16xf32>
    %40 = math.exp %39 : vector<16x16xf32>
    %cst_23 = arith.constant dense<0.000000e+00> : vector<16xf32>
    %41 = vector.multi_reduction <add>, %40, %cst_23 [1] : vector<16x16xf32> to vector<16xf32>
    %42 = vector.shape_cast %41 : vector<16xf32> to vector<16x1xf32>
    %43 = arith.truncf %40 : vector<16x16xf32> to vector<16x16xbf16>
    %cst_24 = arith.constant dense<0.000000e+00> : vector<16x8xf32>
    %44 = tpu.matmul %43, %34, %cst_24 {dimension_numbers = #tpu.dot_dimension_numbers<[1], [0], [0], [1], [0, 0, 1, 1], [], []>} : vector<16x16xbf16>, vector<16x8xbf16>, vector<16x8xf32> -> vector<16x8xf32>
    %45 = tpu.reciprocal %42 : vector<16x1xf32> -> vector<16x1xf32>
    %46 = vector.broadcast %45 : vector<16x1xf32> to vector<16x8xf32>
    %47 = arith.mulf %44, %46 : vector<16x8xf32>
    %c0_25 = arith.constant 0 : index
    %c8_26 = arith.constant 8 : index
    %48 = vector.load %arg8[%c0_25, %c8_26] : memref<16x64xf32, #tpu.memory_space<vmem>>, vector<16x8xf32>
    tpu.vector_store %arg8[%c0_25, %c8_26], %47 {strides = array<i32>} : memref<16x64xf32, #tpu.memory_space<vmem>>, vector<16x8xf32>,
    %c0_27 = arith.constant 0 : index
    %c16 = arith.constant 16 : index
    %49 = vector.load %arg7[%c0_27, %c16] : memref<16x192xf32, #tpu.memory_space<vmem>>, vector<16x8xf32>
    %50 = arith.truncf %49 : vector<16x8xf32> to vector<16x8xbf16>
    %c0_28 = arith.constant 0 : index
    %c80 = arith.constant 80 : index
    %51 = vector.load %arg7[%c0_28, %c80] : memref<16x192xf32, #tpu.memory_space<vmem>>, vector<16x8xf32>
    %52 = arith.truncf %51 : vector<16x8xf32> to vector<16x8xbf16>
    %c0_29 = arith.constant 0 : index
    %c144 = arith.constant 144 : index
    %53 = vector.load %arg7[%c0_29, %c144] : memref<16x192xf32, #tpu.memory_space<vmem>>, vector<16x8xf32>
    %54 = arith.truncf %53 : vector<16x8xf32> to vector<16x8xbf16>
    "tpu.trace_start"() <{level = 10 : i32, message = "qd,kd->qk"}> : () -> ()
    %cst_30 = arith.constant dense<0.000000e+00> : vector<16x16xf32>
    %55 = tpu.matmul %50, %52, %cst_30 {dimension_numbers = #tpu.dot_dimension_numbers<[1], [1], [0], [0], [0, 0, 1, 0], [], []>} : vector<16x8xbf16>, vector<16x8xbf16>, vector<16x16xf32> -> vector<16x16xf32>
    "tpu.trace_stop"() : () -> ()
    %cst_31 = arith.constant dense<0xFF800000> : vector<16xf32>
    %56 = vector.multi_reduction <maximumf>, %55, %cst_31 [1] : vector<16x16xf32> to vector<16xf32>
    %57 = vector.shape_cast %56 : vector<16xf32> to vector<16x1xf32>
    %58 = vector.broadcast %57 : vector<16x1xf32> to vector<16x16xf32>
    %59 = arith.subf %55, %58 : vector<16x16xf32>
    %60 = math.exp %59 : vector<16x16xf32>
    %cst_32 = arith.constant dense<0.000000e+00> : vector<16xf32>
    %61 = vector.multi_reduction <add>, %60, %cst_32 [1] : vector<16x16xf32> to vector<16xf32>
    %62 = vector.shape_cast %61 : vector<16xf32> to vector<16x1xf32>
    %63 = arith.truncf %60 : vector<16x16xf32> to vector<16x16xbf16>
    %cst_33 = arith.constant dense<0.000000e+00> : vector<16x8xf32>
    %64 = tpu.matmul %63, %54, %cst_33 {dimension_numbers = #tpu.dot_dimension_numbers<[1], [0], [0], [1], [0, 0, 1, 1], [], []>} : vector<16x16xbf16>, vector<16x8xbf16>, vector<16x8xf32> -> vector<16x8xf32>
    %65 = tpu.reciprocal %62 : vector<16x1xf32> -> vector<16x1xf32>
    %66 = vector.broadcast %65 : vector<16x1xf32> to vector<16x8xf32>
    %67 = arith.mulf %64, %66 : vector<16x8xf32>
    %c0_34 = arith.constant 0 : index
    %c16_35 = arith.constant 16 : index
    %68 = vector.load %arg8[%c0_34, %c16_35] : memref<16x64xf32, #tpu.memory_space<vmem>>, vector<16x8xf32>
    tpu.vector_store %arg8[%c0_34, %c16_35], %67 {strides = array<i32>} : memref<16x64xf32, #tpu.memory_space<vmem>>, vector<16x8xf32>,
    %c0_36 = arith.constant 0 : index
    %c24 = arith.constant 24 : index
    %69 = vector.load %arg7[%c0_36, %c24] : memref<16x192xf32, #tpu.memory_space<vmem>>, vector<16x8xf32>
    %70 = arith.truncf %69 : vector<16x8xf32> to vector<16x8xbf16>
    %c0_37 = arith.constant 0 : index
    %c88 = arith.constant 88 : index
    %71 = vector.load %arg7[%c0_37, %c88] : memref<16x192xf32, #tpu.memory_space<vmem>>, vector<16x8xf32>
    %72 = arith.truncf %71 : vector<16x8xf32> to vector<16x8xbf16>
    %c0_38 = arith.constant 0 : index
    %c152 = arith.constant 152 : index
    %73 = vector.load %arg7[%c0_38, %c152] : memref<16x192xf32, #tpu.memory_space<vmem>>, vector<16x8xf32>
    %74 = arith.truncf %73 : vector<16x8xf32> to vector<16x8xbf16>
    "tpu.trace_start"() <{level = 10 : i32, message = "qd,kd->qk"}> : () -> ()
    %cst_39 = arith.constant dense<0.000000e+00> : vector<16x16xf32>
    %75 = tpu.matmul %70, %72, %cst_39 {dimension_numbers = #tpu.dot_dimension_numbers<[1], [1], [0], [0], [0, 0, 1, 0], [], []>} : vector<16x8xbf16>, vector<16x8xbf16>, vector<16x16xf32> -> vector<16x16xf32>
    "tpu.trace_stop"() : () -> ()
    %cst_40 = arith.constant dense<0xFF800000> : vector<16xf32>
    %76 = vector.multi_reduction <maximumf>, %75, %cst_40 [1] : vector<16x16xf32> to vector<16xf32>
    %77 = vector.shape_cast %76 : vector<16xf32> to vector<16x1xf32>
    %78 = vector.broadcast %77 : vector<16x1xf32> to vector<16x16xf32>
    %79 = arith.subf %75, %78 : vector<16x16xf32>
    %80 = math.exp %79 : vector<16x16xf32>
    %cst_41 = arith.constant dense<0.000000e+00> : vector<16xf32>
    %81 = vector.multi_reduction <add>, %80, %cst_41 [1] : vector<16x16xf32> to vector<16xf32>
    %82 = vector.shape_cast %81 : vector<16xf32> to vector<16x1xf32>
    %83 = arith.truncf %80 : vector<16x16xf32> to vector<16x16xbf16>
    %cst_42 = arith.constant dense<0.000000e+00> : vector<16x8xf32>
    %84 = tpu.matmul %83, %74, %cst_42 {dimension_numbers = #tpu.dot_dimension_numbers<[1], [0], [0], [1], [0, 0, 1, 1], [], []>} : vector<16x16xbf16>, vector<16x8xbf16>, vector<16x8xf32> -> vector<16x8xf32>
    %85 = tpu.reciprocal %82 : vector<16x1xf32> -> vector<16x1xf32>
    %86 = vector.broadcast %85 : vector<16x1xf32> to vector<16x8xf32>
    %87 = arith.mulf %84, %86 : vector<16x8xf32>
    %c0_43 = arith.constant 0 : index
    %c24_44 = arith.constant 24 : index
    %88 = vector.load %arg8[%c0_43, %c24_44] : memref<16x64xf32, #tpu.memory_space<vmem>>, vector<16x8xf32>
    tpu.vector_store %arg8[%c0_43, %c24_44], %87 {strides = array<i32>} : memref<16x64xf32, #tpu.memory_space<vmem>>, vector<16x8xf32>,
    %c0_45 = arith.constant 0 : index
    %c32 = arith.constant 32 : index
    %89 = vector.load %arg7[%c0_45, %c32] : memref<16x192xf32, #tpu.memory_space<vmem>>, vector<16x8xf32>
    %90 = arith.truncf %89 : vector<16x8xf32> to vector<16x8xbf16>
    %c0_46 = arith.constant 0 : index
    %c96 = arith.constant 96 : index
    %91 = vector.load %arg7[%c0_46, %c96] : memref<16x192xf32, #tpu.memory_space<vmem>>, vector<16x8xf32>
    %92 = arith.truncf %91 : vector<16x8xf32> to vector<16x8xbf16>
    %c0_47 = arith.constant 0 : index
    %c160 = arith.constant 160 : index
    %93 = vector.load %arg7[%c0_47, %c160] : memref<16x192xf32, #tpu.memory_space<vmem>>, vector<16x8xf32>
    %94 = arith.truncf %93 : vector<16x8xf32> to vector<16x8xbf16>
    "tpu.trace_start"() <{level = 10 : i32, message = "qd,kd->qk"}> : () -> ()
    %cst_48 = arith.constant dense<0.000000e+00> : vector<16x16xf32>
    %95 = tpu.matmul %90, %92, %cst_48 {dimension_numbers = #tpu.dot_dimension_numbers<[1], [1], [0], [0], [0, 0, 1, 0], [], []>} : vector<16x8xbf16>, vector<16x8xbf16>, vector<16x16xf32> -> vector<16x16xf32>
    "tpu.trace_stop"() : () -> ()
    %cst_49 = arith.constant dense<0xFF800000> : vector<16xf32>
    %96 = vector.multi_reduction <maximumf>, %95, %cst_49 [1] : vector<16x16xf32> to vector<16xf32>
    %97 = vector.shape_cast %96 : vector<16xf32> to vector<16x1xf32>
    %98 = vector.broadcast %97 : vector<16x1xf32> to vector<16x16xf32>
    %99 = arith.subf %95, %98 : vector<16x16xf32>
    %100 = math.exp %99 : vector<16x16xf32>
    %cst_50 = arith.constant dense<0.000000e+00> : vector<16xf32>
    %101 = vector.multi_reduction <add>, %100, %cst_50 [1] : vector<16x16xf32> to vector<16xf32>
    %102 = vector.shape_cast %101 : vector<16xf32> to vector<16x1xf32>
    %103 = arith.truncf %100 : vector<16x16xf32> to vector<16x16xbf16>
    %cst_51 = arith.constant dense<0.000000e+00> : vector<16x8xf32>
    %104 = tpu.matmul %103, %94, %cst_51 {dimension_numbers = #tpu.dot_dimension_numbers<[1], [0], [0], [1], [0, 0, 1, 1], [], []>} : vector<16x16xbf16>, vector<16x8xbf16>, vector<16x8xf32> -> vector<16x8xf32>
    %105 = tpu.reciprocal %102 : vector<16x1xf32> -> vector<16x1xf32>
    %106 = vector.broadcast %105 : vector<16x1xf32> to vector<16x8xf32>
    %107 = arith.mulf %104, %106 : vector<16x8xf32>
    %c0_52 = arith.constant 0 : index
    %c32_53 = arith.constant 32 : index
    %108 = vector.load %arg8[%c0_52, %c32_53] : memref<16x64xf32, #tpu.memory_space<vmem>>, vector<16x8xf32>
    tpu.vector_store %arg8[%c0_52, %c32_53], %107 {strides = array<i32>} : memref<16x64xf32, #tpu.memory_space<vmem>>, vector<16x8xf32>,
    %c0_54 = arith.constant 0 : index
    %c40 = arith.constant 40 : index
    %109 = vector.load %arg7[%c0_54, %c40] : memref<16x192xf32, #tpu.memory_space<vmem>>, vector<16x8xf32>
    %110 = arith.truncf %109 : vector<16x8xf32> to vector<16x8xbf16>
    %c0_55 = arith.constant 0 : index
    %c104 = arith.constant 104 : index
    %111 = vector.load %arg7[%c0_55, %c104] : memref<16x192xf32, #tpu.memory_space<vmem>>, vector<16x8xf32>
    %112 = arith.truncf %111 : vector<16x8xf32> to vector<16x8xbf16>
    %c0_56 = arith.constant 0 : index
    %c168 = arith.constant 168 : index
    %113 = vector.load %arg7[%c0_56, %c168] : memref<16x192xf32, #tpu.memory_space<vmem>>, vector<16x8xf32>
    %114 = arith.truncf %113 : vector<16x8xf32> to vector<16x8xbf16>
    "tpu.trace_start"() <{level = 10 : i32, message = "qd,kd->qk"}> : () -> ()
    %cst_57 = arith.constant dense<0.000000e+00> : vector<16x16xf32>
    %115 = tpu.matmul %110, %112, %cst_57 {dimension_numbers = #tpu.dot_dimension_numbers<[1], [1], [0], [0], [0, 0, 1, 0], [], []>} : vector<16x8xbf16>, vector<16x8xbf16>, vector<16x16xf32> -> vector<16x16xf32>
    "tpu.trace_stop"() : () -> ()
    %cst_58 = arith.constant dense<0xFF800000> : vector<16xf32>
    %116 = vector.multi_reduction <maximumf>, %115, %cst_58 [1] : vector<16x16xf32> to vector<16xf32>
    %117 = vector.shape_cast %116 : vector<16xf32> to vector<16x1xf32>
    %118 = vector.broadcast %117 : vector<16x1xf32> to vector<16x16xf32>
    %119 = arith.subf %115, %118 : vector<16x16xf32>
    %120 = math.exp %119 : vector<16x16xf32>
    %cst_59 = arith.constant dense<0.000000e+00> : vector<16xf32>
    %121 = vector.multi_reduction <add>, %120, %cst_59 [1] : vector<16x16xf32> to vector<16xf32>
    %122 = vector.shape_cast %121 : vector<16xf32> to vector<16x1xf32>
    %123 = arith.truncf %120 : vector<16x16xf32> to vector<16x16xbf16>
    %cst_60 = arith.constant dense<0.000000e+00> : vector<16x8xf32>
    %124 = tpu.matmul %123, %114, %cst_60 {dimension_numbers = #tpu.dot_dimension_numbers<[1], [0], [0], [1], [0, 0, 1, 1], [], []>} : vector<16x16xbf16>, vector<16x8xbf16>, vector<16x8xf32> -> vector<16x8xf32>
    %125 = tpu.reciprocal %122 : vector<16x1xf32> -> vector<16x1xf32>
    %126 = vector.broadcast %125 : vector<16x1xf32> to vector<16x8xf32>
    %127 = arith.mulf %124, %126 : vector<16x8xf32>
    %c0_61 = arith.constant 0 : index
    %c40_62 = arith.constant 40 : index
    %128 = vector.load %arg8[%c0_61, %c40_62] : memref<16x64xf32, #tpu.memory_space<vmem>>, vector<16x8xf32>
    tpu.vector_store %arg8[%c0_61, %c40_62], %127 {strides = array<i32>} : memref<16x64xf32, #tpu.memory_space<vmem>>, vector<16x8xf32>,
    %c0_63 = arith.constant 0 : index
    %c48 = arith.constant 48 : index
    %129 = vector.load %arg7[%c0_63, %c48] : memref<16x192xf32, #tpu.memory_space<vmem>>, vector<16x8xf32>
    %130 = arith.truncf %129 : vector<16x8xf32> to vector<16x8xbf16>
    %c0_64 = arith.constant 0 : index
    %c112 = arith.constant 112 : index
    %131 = vector.load %arg7[%c0_64, %c112] : memref<16x192xf32, #tpu.memory_space<vmem>>, vector<16x8xf32>
    %132 = arith.truncf %131 : vector<16x8xf32> to vector<16x8xbf16>
    %c0_65 = arith.constant 0 : index
    %c176 = arith.constant 176 : index
    %133 = vector.load %arg7[%c0_65, %c176] : memref<16x192xf32, #tpu.memory_space<vmem>>, vector<16x8xf32>
    %134 = arith.truncf %133 : vector<16x8xf32> to vector<16x8xbf16>
    "tpu.trace_start"() <{level = 10 : i32, message = "qd,kd->qk"}> : () -> ()
    %cst_66 = arith.constant dense<0.000000e+00> : vector<16x16xf32>
    %135 = tpu.matmul %130, %132, %cst_66 {dimension_numbers = #tpu.dot_dimension_numbers<[1], [1], [0], [0], [0, 0, 1, 0], [], []>} : vector<16x8xbf16>, vector<16x8xbf16>, vector<16x16xf32> -> vector<16x16xf32>
    "tpu.trace_stop"() : () -> ()
    %cst_67 = arith.constant dense<0xFF800000> : vector<16xf32>
    %136 = vector.multi_reduction <maximumf>, %135, %cst_67 [1] : vector<16x16xf32> to vector<16xf32>
    %137 = vector.shape_cast %136 : vector<16xf32> to vector<16x1xf32>
    %138 = vector.broadcast %137 : vector<16x1xf32> to vector<16x16xf32>
    %139 = arith.subf %135, %138 : vector<16x16xf32>
    %140 = math.exp %139 : vector<16x16xf32>
    %cst_68 = arith.constant dense<0.000000e+00> : vector<16xf32>
    %141 = vector.multi_reduction <add>, %140, %cst_68 [1] : vector<16x16xf32> to vector<16xf32>
    %142 = vector.shape_cast %141 : vector<16xf32> to vector<16x1xf32>
    %143 = arith.truncf %140 : vector<16x16xf32> to vector<16x16xbf16>
    %cst_69 = arith.constant dense<0.000000e+00> : vector<16x8xf32>
    %144 = tpu.matmul %143, %134, %cst_69 {dimension_numbers = #tpu.dot_dimension_numbers<[1], [0], [0], [1], [0, 0, 1, 1], [], []>} : vector<16x16xbf16>, vector<16x8xbf16>, vector<16x8xf32> -> vector<16x8xf32>
    %145 = tpu.reciprocal %142 : vector<16x1xf32> -> vector<16x1xf32>
    %146 = vector.broadcast %145 : vector<16x1xf32> to vector<16x8xf32>
    %147 = arith.mulf %144, %146 : vector<16x8xf32>
    %c0_70 = arith.constant 0 : index
    %c48_71 = arith.constant 48 : index
    %148 = vector.load %arg8[%c0_70, %c48_71] : memref<16x64xf32, #tpu.memory_space<vmem>>, vector<16x8xf32>
    tpu.vector_store %arg8[%c0_70, %c48_71], %147 {strides = array<i32>} : memref<16x64xf32, #tpu.memory_space<vmem>>, vector<16x8xf32>,
    %c0_72 = arith.constant 0 : index
    %c56 = arith.constant 56 : index
    %149 = vector.load %arg7[%c0_72, %c56] : memref<16x192xf32, #tpu.memory_space<vmem>>, vector<16x8xf32>
    %150 = arith.truncf %149 : vector<16x8xf32> to vector<16x8xbf16>
    %c0_73 = arith.constant 0 : index
    %c120 = arith.constant 120 : index
    %151 = vector.load %arg7[%c0_73, %c120] : memref<16x192xf32, #tpu.memory_space<vmem>>, vector<16x8xf32>
    %152 = arith.truncf %151 : vector<16x8xf32> to vector<16x8xbf16>
    %c0_74 = arith.constant 0 : index
    %c184 = arith.constant 184 : index
    %153 = vector.load %arg7[%c0_74, %c184] : memref<16x192xf32, #tpu.memory_space<vmem>>, vector<16x8xf32>
    %154 = arith.truncf %153 : vector<16x8xf32> to vector<16x8xbf16>
    "tpu.trace_start"() <{level = 10 : i32, message = "qd,kd->qk"}> : () -> ()
    %cst_75 = arith.constant dense<0.000000e+00> : vector<16x16xf32>
    %155 = tpu.matmul %150, %152, %cst_75 {dimension_numbers = #tpu.dot_dimension_numbers<[1], [1], [0], [0], [0, 0, 1, 0], [], []>} : vector<16x8xbf16>, vector<16x8xbf16>, vector<16x16xf32> -> vector<16x16xf32>
    "tpu.trace_stop"() : () -> ()
    %cst_76 = arith.constant dense<0xFF800000> : vector<16xf32>
    %156 = vector.multi_reduction <maximumf>, %155, %cst_76 [1] : vector<16x16xf32> to vector<16xf32>
    %157 = vector.shape_cast %156 : vector<16xf32> to vector<16x1xf32>
    %158 = vector.broadcast %157 : vector<16x1xf32> to vector<16x16xf32>
    %159 = arith.subf %155, %158 : vector<16x16xf32>
    %160 = math.exp %159 : vector<16x16xf32>
    %cst_77 = arith.constant dense<0.000000e+00> : vector<16xf32>
    %161 = vector.multi_reduction <add>, %160, %cst_77 [1] : vector<16x16xf32> to vector<16xf32>
    %162 = vector.shape_cast %161 : vector<16xf32> to vector<16x1xf32>
    %163 = arith.truncf %160 : vector<16x16xf32> to vector<16x16xbf16>
    %cst_78 = arith.constant dense<0.000000e+00> : vector<16x8xf32>
    %164 = tpu.matmul %163, %154, %cst_78 {dimension_numbers = #tpu.dot_dimension_numbers<[1], [0], [0], [1], [0, 0, 1, 1], [], []>} : vector<16x16xbf16>, vector<16x8xbf16>, vector<16x8xf32> -> vector<16x8xf32>
    %165 = tpu.reciprocal %162 : vector<16x1xf32> -> vector<16x1xf32>
    %166 = vector.broadcast %165 : vector<16x1xf32> to vector<16x8xf32>
    %167 = arith.mulf %164, %166 : vector<16x8xf32>
    %c0_79 = arith.constant 0 : index
    %c56_80 = arith.constant 56 : index
    %168 = vector.load %arg8[%c0_79, %c56_80] : memref<16x64xf32, #tpu.memory_space<vmem>>, vector<16x8xf32>
    tpu.vector_store %arg8[%c0_79, %c56_80], %167 {strides = array<i32>} : memref<16x64xf32, #tpu.memory_space<vmem>>, vector<16x8xf32>,
    %c0_81 = arith.constant 0 : index
    %c0_82 = arith.constant 0 : index
    %169 = vector.load %arg8[%c0_81, %c0_82] : memref<16x64xf32, #tpu.memory_space<vmem>>, vector<16x64xf32>
    %170 = arith.truncf %169 : vector<16x64xf32> to vector<16x64xbf16>
    %c0_83 = arith.constant 0 : index
    %c0_84 = arith.constant 0 : index
    %171 = vector.load %arg4[%c0_83, %c0_84] : memref<64x64xbf16, #tpu.memory_space<vmem>>, vector<64x64xbf16>
    %cst_85 = arith.constant dense<0.000000e+00> : vector<16x64xf32>
    %172 = tpu.matmul %170, %171, %cst_85 {dimension_numbers = #tpu.dot_dimension_numbers<[1], [0], [0], [1], [0, 0, 1, 1], [], []>} : vector<16x64xbf16>, vector<64x64xbf16>, vector<16x64xf32> -> vector<16x64xf32>
    %c0_86 = arith.constant 0 : index
    %c0_87 = arith.constant 0 : index
    %173 = vector.load %arg5[%c0_86, %c0_87] : memref<1x64xf32, #tpu.memory_space<vmem>>, vector<1x64xf32>
    %174 = vector.broadcast %173 : vector<1x64xf32> to vector<16x64xf32>
    %175 = arith.addf %172, %174 : vector<16x64xf32>
    %c0_88 = arith.constant 0 : index
    %c0_89 = arith.constant 0 : index
    %c0_90 = arith.constant 0 : index
    %176 = vector.load %arg6[%c0_88, %c0_89, %c0_90] : memref<1x16x64xf32, #tpu.memory_space<vmem>>, vector<1x16x64xf32>
    %177 = vector.shape_cast %176 : vector<1x16x64xf32> to vector<16x64xf32>
    %178 = vector.shape_cast %175 : vector<16x64xf32> to vector<1x16x64xf32>
    tpu.vector_store %arg6[%c0_88, %c0_89, %c0_90], %178 {strides = array<i32>} : memref<1x16x64xf32, #tpu.memory_space<vmem>>, vector<1x16x64xf32>,
    return
  }
  func.func @transform_0(%arg0: i32) -> (i32, i32, i32) {
    %c0_i32 = arith.constant 0 : i32
    %c0_i32_0 = arith.constant 0 : i32
    %c0_i32_1 = arith.constant 0 : i32
    return %arg0, %c0_i32, %c0_i32_0 : i32, i32, i32
  }
  func.func @transform_1(%arg0: i32) -> (i32, i32) {
    %c0_i32 = arith.constant 0 : i32
    %c0_i32_0 = arith.constant 0 : i32
    %c0_i32_1 = arith.constant 0 : i32
    return %c0_i32, %c0_i32_0 : i32, i32
  }
  func.func @transform_2(%arg0: i32) -> (i32, i32) {
    %c0_i32 = arith.constant 0 : i32
    %c0_i32_0 = arith.constant 0 : i32
    %c0_i32_1 = arith.constant 0 : i32
    return %c0_i32, %c0_i32_0 : i32, i32
  }
  func.func @transform_3(%arg0: i32) -> (i32, i32) {
    %c0_i32 = arith.constant 0 : i32
    %c0_i32_0 = arith.constant 0 : i32
    %c0_i32_1 = arith.constant 0 : i32
    return %c0_i32, %c0_i32_0 : i32, i32
  }
  func.func @transform_4(%arg0: i32) -> (i32, i32) {
    %c0_i32 = arith.constant 0 : i32
    %c0_i32_0 = arith.constant 0 : i32
    %c0_i32_1 = arith.constant 0 : i32
    return %c0_i32, %c0_i32_0 : i32, i32
  }
  func.func @transform_5(%arg0: i32) -> (i32, i32, i32) {
    %c0_i32 = arith.constant 0 : i32
    %c0_i32_0 = arith.constant 0 : i32
    %c0_i32_1 = arith.constant 0 : i32
    return %arg0, %c0_i32, %c0_i32_0 : i32, i32, i32
  }
}

</mosaic_0001>

<llo_original>
// kernel: tpu_custom_call.1
$region0: #{tpu_custom_call.1}
  #allocation0 [shape = 'u32[]', space=smem, size = 0x4, offset = 0x4, fixed_abs, tag = 'smem constant byte address 0x4 - core index']
  #allocation1 [shape = 'u32[144,128]{1,0:T(1,128)}', space=vmem, size = 0x12000, scoped, tag = 'internal scratch']
  #allocation2 [shape = 'f32[16,192]{1,0:T(8,128)}', space=vmem, size = 0x4000, scoped, tag = 'scratch operand']
  #allocation3 [shape = 'f32[16,64]{1,0:T(8,128)}', space=vmem, size = 0x2000, scoped, tag = 'scratch operand']
  %s0 = inlined_call_operand.hbm [shape: f32[2,16,64], index: 0, kind: input, shape index: {}]
  %s1 = inlined_call_operand.hbm [shape: bf16[64,192], index: 1, kind: input, shape index: {}]
  %s2 = inlined_call_operand.vmem [shape: f32[1,192], index: 2, kind: input, shape index: {}]
  %s3 = inlined_call_operand.hbm [shape: bf16[64,64], index: 3, kind: input, shape index: {}]
  %s4 = inlined_call_operand.vmem [shape: f32[1,64], index: 4, kind: input, shape index: {}]
  %s5 = inlined_call_operand.hbm [shape: f32[2,16,64], index: 5, kind: output, shape index: {}]
  %s6 = sld [smem:[#allocation0]]
  $region65: #{tpu_custom_call.1} parent=0
    _
  %s8 = ssub.s32 1, %s6
  %s9 = scalar_select 0, %s8, %s6
  $region1: #{tpu_custom_call.1} parent=0
    #allocation4 [shape = 'u8[16384]{0}', space=vmem, size = 0x4000, scoped, tag = 'input window, operand 0']
    #allocation5 [shape = 's32[2]{0}', space=sflag, size = 0x8, scoped, tag = 'scoped memory for tpu_custom_call.1']
    #allocation6 [shape = 's32[2]{0}', space=sflag, size = 0x8, scoped, tag = 'scoped memory for tpu_custom_call.1']
    #allocation7 [shape = 'u8[32768]{0}', space=vmem, size = 0x8000, scoped, tag = 'input window, operand 1, single buffered']
    #allocation8 [shape = 's32[1]{0}', space=sflag, size = 0x4, scoped, tag = 'scoped memory for tpu_custom_call.1']
    #allocation9 [shape = 'u8[16384]{0}', space=vmem, size = 0x4000, scoped, tag = 'input window, operand 3, single buffered']
    #allocation10 [shape = 'u8[16384]{0}', space=vmem, size = 0x4000, scoped, tag = 'output window, operand 0']
    %10 = vsyncpa [#allocation5], 0
    %s11 = scalar_lea.sflag [#allocation5], 1
    %12 = vsyncpa %s11, 0
    %13 = vsyncpa [#allocation8], 0
    %14 = vsyncpa [#allocation6], 0
    %s15 = scalar_lea.sflag [#allocation6], 1
    %16 = vsyncpa %s15, 0
    loop: start=0, step=1, limit=4
    $region2: #{tpu_custom_call.1} parent=1 // loop_pre_header
      _
    $region3: #{tpu_custom_call.1} parent=1 // loop_header
      %s18 = sphi 0, %s22
      %p19 = scmp.ge.s32.totalorder %s18, 4
      %s28 = sphi 0, %s30
      %s31 = sphi 0, %s28
      %s32 = sphi 0, %s31
      %s48 = sphi 0, %s32
      %s52 = sphi 0, %s52
      %s54 = sphi 0, %s52
      %s55 = sphi 0, %s54
      %s69 = sphi 0, %s55
      %s73 = sphi 0, %s73
      %s75 = sphi 0, %s73
      %s76 = sphi 0, %s75
      %s90 = sphi 0, %s76
      %s94 = sphi 0, %s94
      %s96 = sphi 0, %s94
      %s97 = sphi 0, %s96
      %s111 = sphi 0, %s97
      %s115 = sphi 0, %s115
      %s117 = sphi 0, %s115
      %s118 = sphi 0, %s117
      %s132 = sphi 0, %s118
      %s138 = sphi 0, %s140
      %s141 = sphi 0, %s138
      %s142 = sphi 0, %s141
      %s158 = sphi 0, %s142
    $region4: #{tpu_custom_call.1} parent=1 // loop_header_branch
      %21 = sbr.rel (%p19) target = $region8
    $region5: #{tpu_custom_call.1} parent=1 // loop_body
      %s23 = ssub.s32 %s18, 1
      %s24 = ssub.s32 %s18, 2
      %s25 = sadd.s32 %s18, 1
      %s26 = ssub.s32 %s18, %s25
      %p27 = scmp.eq.s32.totalorder %s26, 0
      %s29 = sadd.s32 %s28, 1
      %s30 = scalar_select %p27, %s28, %s29
      %p33 = pneg %p27
      %p34 = scmp.eq.s32.totalorder %s18, 1
      %p35 = por %p33, %p34
      %p36 = scmp.ne.s32.totalorder %s28, %s31
      %p37 = scmp.eq.s32.totalorder %s18, 0
      %p38 = por %p36, %p37
      %p39 = scmp.ne.s32.totalorder %s28, %s31
      %p40 = scmp.eq.s32.totalorder %s23, 1
      %p41 = por %p39, %p40
      %p42 = scmp.ne.s32.totalorder %s31, %s32
      %p43 = scmp.eq.s32.totalorder %s23, 0
      %p44 = por %p42, %p43
      %p45 = scmp.ne.s32.totalorder %s31, %s32
      %p46 = scmp.eq.s32.totalorder %s24, 1
      %p47 = por %p45, %p46
      %p49 = scmp.ne.s32.totalorder %s32, %s48
      %p50 = scmp.eq.s32.totalorder %s24, 0
      %p51 = por %p49, %p50
      %s53 = sadd.s32 %s52, 1
      %p56 = scmp.eq.s32.totalorder %s18, 1
      %p57 = scmp.ne.s32.totalorder %s52, %s54
      %p58 = scmp.eq.s32.totalorder %s18, 0
      %p59 = por %p57, %p58
      %p60 = scmp.ne.s32.totalorder %s52, %s54
      %p61 = scmp.eq.s32.totalorder %s23, 1
      %p62 = por %p60, %p61
      %p63 = scmp.ne.s32.totalorder %s54, %s55
      %p64 = scmp.eq.s32.totalorder %s23, 0
      %p65 = por %p63, %p64
      %p66 = scmp.ne.s32.totalorder %s54, %s55
      %p67 = scmp.eq.s32.totalorder %s24, 1
      %p68 = por %p66, %p67
      %p70 = scmp.ne.s32.totalorder %s55, %s69
      %p71 = scmp.eq.s32.totalorder %s24, 0
      %p72 = por %p70, %p71
      %s74 = sadd.s32 %s73, 1
      %p77 = scmp.eq.s32.totalorder %s18, 1
      %p78 = scmp.ne.s32.totalorder %s73, %s75
      %p79 = scmp.eq.s32.totalorder %s18, 0
      %p80 = por %p78, %p79
      %p81 = scmp.ne.s32.totalorder %s73, %s75
      %p82 = scmp.eq.s32.totalorder %s23, 1
      %p83 = por %p81, %p82
      %p84 = scmp.ne.s32.totalorder %s75, %s76
      %p85 = scmp.eq.s32.totalorder %s23, 0
      %p86 = por %p84, %p85
      %p87 = scmp.ne.s32.totalorder %s75, %s76
      %p88 = scmp.eq.s32.totalorder %s24, 1
      %p89 = por %p87, %p88
      %p91 = scmp.ne.s32.totalorder %s76, %s90
      %p92 = scmp.eq.s32.totalorder %s24, 0
      %p93 = por %p91, %p92
      %s95 = sadd.s32 %s94, 1
      %p98 = scmp.eq.s32.totalorder %s18, 1
      %p99 = scmp.ne.s32.totalorder %s94, %s96
      %p100 = scmp.eq.s32.totalorder %s18, 0
      %p101 = por %p99, %p100
      %p102 = scmp.ne.s32.totalorder %s94, %s96
      %p103 = scmp.eq.s32.totalorder %s23, 1
      %p104 = por %p102, %p103
      %p105 = scmp.ne.s32.totalorder %s96, %s97
      %p106 = scmp.eq.s32.totalorder %s23, 0
      %p107 = por %p105, %p106
      %p108 = scmp.ne.s32.totalorder %s96, %s97
      %p109 = scmp.eq.s32.totalorder %s24, 1
      %p110 = por %p108, %p109
      %p112 = scmp.ne.s32.totalorder %s97, %s111
      %p113 = scmp.eq.s32.totalorder %s24, 0
      %p114 = por %p112, %p113
      %s116 = sadd.s32 %s115, 1
      %p119 = scmp.eq.s32.totalorder %s18, 1
      %p120 = scmp.ne.s32.totalorder %s115, %s117
      %p121 = scmp.eq.s32.totalorder %s18, 0
      %p122 = por %p120, %p121
      %p123 = scmp.ne.s32.totalorder %s115, %s117
      %p124 = scmp.eq.s32.totalorder %s23, 1
      %p125 = por %p123, %p124
      %p126 = scmp.ne.s32.totalorder %s117, %s118
      %p127 = scmp.eq.s32.totalorder %s23, 0
      %p128 = por %p126, %p127
      %p129 = scmp.ne.s32.totalorder %s117, %s118
      %p130 = scmp.eq.s32.totalorder %s24, 1
      %p131 = por %p129, %p130
      %p133 = scmp.ne.s32.totalorder %s118, %s132
      %p134 = scmp.eq.s32.totalorder %s24, 0
      %p135 = por %p133, %p134
      %s136 = ssub.s32 %s18, %s25
      %p137 = scmp.eq.s32.totalorder %s136, 0
      %s139 = sadd.s32 %s138, 1
      %s140 = scalar_select %p137, %s138, %s139
      %p143 = pneg %p137
      %p144 = scmp.eq.s32.totalorder %s18, 1
      %p145 = por %p143, %p144
      %p146 = scmp.ne.s32.totalorder %s138, %s141
      %p147 = scmp.eq.s32.totalorder %s18, 0
      %p148 = por %p146, %p147
      %p149 = scmp.ne.s32.totalorder %s138, %s141
      %p150 = scmp.eq.s32.totalorder %s23, 1
      %p151 = por %p149, %p150
      %p152 = scmp.ne.s32.totalorder %s141, %s142
      %p153 = scmp.eq.s32.totalorder %s23, 0
      %p154 = por %p152, %p153
      %p155 = scmp.ne.s32.totalorder %s141, %s142
      %p156 = scmp.eq.s32.totalorder %s24, 1
      %p157 = por %p155, %p156
      %p159 = scmp.ne.s32.totalorder %s142, %s158
      %p160 = scmp.eq.s32.totalorder %s24, 0
      %p161 = por %p159, %p160
      %p162 = scmp.le.s32.totalorder 1, %s18
      %p163 = scmp.lt.s32.totalorder %s18, 3
      %p164 = pnand %p162, %p163
      %p165 = pneg %p164
      // Predicated region
      $region9: #{tpu_custom_call.1} parent=5 // pred_check
        _
      $region10: #{tpu_custom_call.1} parent=5 // pred_check_branch
        %167 = sbr.rel (%p164) target = $region12
      $region11: #{tpu_custom_call.1} parent=5 // pred_region
        %s168 = ssub.s32 %s18, 1
        // Predicated region
        $region13: #{tpu_custom_call.1} parent=11 // pred_check
          %p169 = pneg %p65
        $region14: #{tpu_custom_call.1} parent=11 // pred_check_branch
          %171 = sbr.rel (%p169) target = $region16
        $region15: #{tpu_custom_call.1} parent=11 // pred_region
          %s173 = ssub.s32 1024, 1024
          %174 = vsyncadd [#allocation8], %s173
          %s175 = sshll.u32 [#allocation7], 4
          %s176 = int_to_ptr.vmem [resolvable:$true] %s175
          %181 = dma.hbm_to_vmem [thread:$0]  %s1, 1024, %s176, [#allocation8], 128, 128, 8
        $region16: #{tpu_custom_call.1} parent=11 // pred_fallthru
          _
        // Predicated region
        $region17: #{tpu_custom_call.1} parent=11 // pred_check
          %p182 = pneg %p86
        $region18: #{tpu_custom_call.1} parent=11 // pred_check_branch
          %184 = sbr.rel (%p182) target = $region20
        $region19: #{tpu_custom_call.1} parent=11 // pred_region
          _
        $region20: #{tpu_custom_call.1} parent=11 // pred_fallthru
          _
        // Predicated region
        $region21: #{tpu_custom_call.1} parent=11 // pred_check
          %p185 = pneg %p107
        $region22: #{tpu_custom_call.1} parent=11 // pred_check_branch
          %187 = sbr.rel (%p185) target = $region24
        $region23: #{tpu_custom_call.1} parent=11 // pred_region
          %s189 = ssub.s32 512, 512
          %190 = vsyncadd [#allocation8], %s189
          %s191 = sshll.u32 [#allocation9], 4
          %s192 = int_to_ptr.vmem [resolvable:$true] %s191
          %197 = dma.hbm_to_vmem [thread:$0]  %s3, 512, %s192, [#allocation8], 64, 64, 4
        $region24: #{tpu_custom_call.1} parent=11 // pred_fallthru
          _
        // Predicated region
        $region25: #{tpu_custom_call.1} parent=11 // pred_check
          %p198 = pneg %p128
        $region26: #{tpu_custom_call.1} parent=11 // pred_check_branch
          %200 = sbr.rel (%p198) target = $region28
        $region27: #{tpu_custom_call.1} parent=11 // pred_region
          _
        $region28: #{tpu_custom_call.1} parent=11 // pred_fallthru
          _
      $region12: #{tpu_custom_call.1} parent=5 // pred_fallthru
        _
      %p201 = scmp.lt.s32.totalorder %s18, 2
      // Predicated region
      $region29: #{tpu_custom_call.1} parent=5 // pred_check
        %p202 = pneg %p201
      $region30: #{tpu_custom_call.1} parent=5 // pred_check_branch
        %204 = sbr.rel (%p202) target = $region32
      $region31: #{tpu_custom_call.1} parent=5 // pred_region
        // Predicated region
        $region33: #{tpu_custom_call.1} parent=31 // pred_check
          %p205 = pneg %p38
        $region34: #{tpu_custom_call.1} parent=31 // pred_check_branch
          %207 = sbr.rel (%p205) target = $region36
        $region35: #{tpu_custom_call.1} parent=31 // pred_region
          %s208 = sand.u32 %s28, 1
          %s209 = scalar_lea.sflag [#allocation5], %s208
          %s210 = sand.u32 %s28, 1
          %s211 = smul.addr %s210, 16
          %s212 = scalar_lea.vmem [#allocation4], %s211
          %s214 = ssub.s32 256, 256
          %215 = vsyncadd %s209, %s214
          %s216 = smul.addr %s18, 2
          %s217 = smul.addr %s216, 128
          %s218 = scalar_lea.hbm %s0, %s217
          %s219 = sshll.u32 %s212, 4
          %s220 = int_to_ptr.vmem [resolvable:$true] %s219
          %225 = dma.hbm_to_vmem [thread:$0]  %s218, 256, %s220, %s209, 128, 128, 8
        $region36: #{tpu_custom_call.1} parent=31 // pred_fallthru
          _
      $region32: #{tpu_custom_call.1} parent=5 // pred_fallthru
        _
      %p226 = scmp.le.s32.totalorder 1, %s18
      %p227 = scmp.lt.s32.totalorder %s18, 3
      %p228 = pnand %p226, %p227
      %p229 = pneg %p228
      // Predicated region
      $region37: #{tpu_custom_call.1} parent=5 // pred_check
        _
      $region38: #{tpu_custom_call.1} parent=5 // pred_check_branch
        %231 = sbr.rel (%p228) target = $region40
      $region39: #{tpu_custom_call.1} parent=5 // pred_region
        %s232 = ssub.s32 %s18, 1
        %s233 = sand.u32 %s31, 1
        %s234 = scalar_lea.sflag [#allocation5], %s233
        %s235 = sand.u32 %s31, 1
        %s236 = smul.addr %s235, 16
        %s237 = scalar_lea.vmem [#allocation4], %s236
        // Predicated region
        $region41: #{tpu_custom_call.1} parent=39 // pred_check
          %p238 = pneg %p44
        $region42: #{tpu_custom_call.1} parent=39 // pred_check_branch
          %240 = sbr.rel (%p238) target = $region44
        $region43: #{tpu_custom_call.1} parent=39 // pred_region
          %241 = dma.done %s234, 256
        $region44: #{tpu_custom_call.1} parent=39 // pred_fallthru
          _
        // Predicated region
        $region45: #{tpu_custom_call.1} parent=39 // pred_check
          %p242 = pneg %p65
        $region46: #{tpu_custom_call.1} parent=39 // pred_check_branch
          %244 = sbr.rel (%p242) target = $region48
        $region47: #{tpu_custom_call.1} parent=39 // pred_region
          %245 = dma.done [#allocation8], 1024
        $region48: #{tpu_custom_call.1} parent=39 // pred_fallthru
          _
        // Predicated region
        $region49: #{tpu_custom_call.1} parent=39 // pred_check
          %p246 = pneg %p107
        $region50: #{tpu_custom_call.1} parent=39 // pred_check_branch
          %248 = sbr.rel (%p246) target = $region52
        $region51: #{tpu_custom_call.1} parent=39 // pred_region
          %249 = dma.done [#allocation8], 512
        $region52: #{tpu_custom_call.1} parent=39 // pred_fallthru
          _
        %s250 = sand.u32 %s31, 1
        %s251 = scalar_lea.sflag [#allocation5], %s250
        %s252 = sand.u32 %s31, 1
        %s253 = smul.addr %s252, 16
        %s254 = scalar_lea.vmem [#allocation4], %s253
        %p255 = pneg %p44
        %p256 = pneg %p41
        %p257 = pneg %p65
        %p258 = pneg %p62
        %p259 = pneg %p86
        %p260 = pneg %p83
        %p261 = pneg %p107
        %p262 = pneg %p104
        %p263 = pneg %p128
        %p264 = pneg %p125
        %p265 = pneg %p154
        %p266 = pneg %p151
        %s267 = sand.u32 %s141, 1
        %s268 = scalar_lea.sflag [#allocation6], %s267
        %s269 = sand.u32 %s141, 1
        %s270 = smul.addr %s269, 16
        %s271 = scalar_lea.vmem [#allocation10], %s270
        %v273 = vld [vmem:[%s237] sm:$0xff]
        %v274 = vld [vmem:[%s237 + $0x8] sm:$0xff]
        %v275 = vpack.c.bf16 %v274, %v273
        %v276 = vld [vmem:[#allocation7] sm:$0xff]
        %v277 = vld [vmem:[#allocation7 + $0x8] sm:$0xff]
        %v278 = vld [vmem:[#allocation7 + $0x10] sm:$0xff]
        %v279 = vld [vmem:[#allocation7 + $0x18] sm:$0xff]
        %v280 = vld [vmem:[#allocation7 + $0x20] sm:$0xff]
        %v281 = vld [vmem:[#allocation7 + $0x28] sm:$0xff]
        %v282 = vld [vmem:[#allocation7 + $0x30] sm:$0xff]
        %v283 = vld [vmem:[#allocation7 + $0x38] sm:$0xff]
        %v284 = vld [vmem:[%s2] sm:$0x3]
        %v286 = vlaneseq
        %v287 = vshrl.u32 %v286, 7
        %v288 = vsub.s32 0, %v287
        %v289 = vrot.slane %v284, %v288
        %v290 = vlaneseq
        %v291 = vshrl.u32 %v290, 7
        %v292 = vsub.s32 1, %v291
        %v293 = vrot.slane %v284, %v292
        %v304 = vunpack.c.l.b16 %v276
        %v305 = vunpack.c.h.b16 %v276
        %v306 = vunpack.c.l.b16 %v277
        %v307 = vunpack.c.h.b16 %v277
        %v308 = vunpack.c.l.b16 %v278
        %v309 = vunpack.c.h.b16 %v278
        %v310 = vunpack.c.l.b16 %v279
        %v311 = vunpack.c.h.b16 %v279
        %v312 = vunpack.c.l.b16 %v280
        %v313 = vunpack.c.h.b16 %v280
        %v314 = vunpack.c.l.b16 %v281
        %v315 = vunpack.c.h.b16 %v281
        %v316 = vunpack.c.l.b16 %v282
        %v317 = vunpack.c.h.b16 %v282
        %v318 = vunpack.c.l.b16 %v283
        %v319 = vunpack.c.h.b16 %v283
        %v320 = vpack.c.b16 %v306, %v304
        %v321 = vpack.c.b16 %v307, %v305
        %v322 = vpack.c.b16 %v310, %v308
        %v323 = vpack.c.b16 %v311, %v309
        %v324 = vpack.c.b16 %v314, %v312
        %v325 = vpack.c.b16 %v315, %v313
        %v326 = vpack.c.b16 %v318, %v316
        %v327 = vpack.c.b16 %v319, %v317
        %vm336 = vcmask 523264
        %v338 = vsel %vm336, %v275, 0
        %340 = vmatprep.subr.bf16.mxu0 %v321
        %341 = vmatpush1.bf16.msra.mxu0 %v320
        %342 = vmatprep.subr.bf16.mxu0 %v323
        %343 = vmatpush1.bf16.msra.mxu0 %v322
        %344 = vmatprep.subr.bf16.mxu0 %v325
        %345 = vmatpush1.bf16.msra.mxu0 %v324
        %346 = vmatprep.subr.bf16.mxu0 %v327
        %347 = vmatpush1.bf16.msra.mxu0 %v326
        %348 = vmatprep.subr.bf16.mxu0 0
        %349 = vmatpush1.bf16.msra.mxu0 0
        %350 = vmatprep.subr.bf16.mxu0 0
        %351 = vmatpush1.bf16.msra.mxu0 0
        %352 = vmatprep.subr.bf16.mxu0 0
        %353 = vmatpush1.bf16.msra.mxu0 0
        %354 = vmatprep.subr.bf16.mxu0 0
        %355 = vmatpush1.bf16.msra.mxu0 0
        %356 = vmatprep.subr.bf16.mxu0 0
        %357 = vmatpush1.bf16.msra.mxu0 0
        %358 = vmatprep.subr.bf16.mxu0 0
        %359 = vmatpush1.bf16.msra.mxu0 0
        %360 = vmatprep.subr.bf16.mxu0 0
        %361 = vmatpush1.bf16.msra.mxu0 0
        %362 = vmatprep.subr.bf16.mxu0 0
        %363 = vmatpush1.bf16.msra.mxu0 0
        %364 = vmatprep.subr.bf16.mxu0 0
        %365 = vmatpush1.bf16.msra.mxu0 0
        %366 = vmatprep.subr.bf16.mxu0 0
        %367 = vmatpush1.bf16.msra.mxu0 0
        %368 = vmatprep.subr.bf16.mxu0 0
        %369 = vmatpush1.bf16.msra.mxu0 0
        %370 = vmatprep.subr.bf16.mxu0 0
        %371 = vmatpush1.bf16.msra.mxu0 0
        %372 = vmatprep.mubr.bf16.mxu0 0
        %373 = vmatmul.mubr.bf16.gmra.mrb[0].mxu0 %v338
        %v374 = vpop.f32.mrb[0].mxu0
        %v375 = vadd.f32 %v289, %v374
        %v376 = vpop.f32.mrb[0].mxu0
        %v377 = vadd.f32 %v293, %v376
        %v378 = vpop.f32.mrb[0].mxu0
        %v379 = vadd.f32 %v289, %v378
        %v380 = vpop.f32.mrb[0].mxu0
        %v381 = vadd.f32 %v293, %v380
        %382 = vdwg.mxu0
        %383 = vst [vmem:[#allocation2] sm:$0xff] %v375
        %384 = vst.msk [vmem:[#allocation2 + $0x8] sm:$0xff] %vm336, %v377
        %385 = vst [vmem:[#allocation2 + $0x10] sm:$0xff] %v379
        %386 = vst.msk [vmem:[#allocation2 + $0x18] sm:$0xff] %vm336, %v381
        %v387 = vld [vmem:[#allocation2] sm:$0xff]
        %v388 = vld [vmem:[#allocation2 + $0x10] sm:$0xff]
        %v389 = vpack.c.bf16 %v388, %v387
        %v390 = vld [vmem:[#allocation2 + $0x8] sm:$0xff]
        %v391 = vld [vmem:[#allocation2 + $0x18] sm:$0xff]
        %v392 = vpack.c.bf16 %v391, %v390
        %394 = vrot.lane.b32.xlu0 %v389, 64
        %v395 = vpop.permute.xlu0 %394
        %vm396 = vcmask 64512
        %v398 = vsel %vm396, %v389, 0
        %v401 = vsel %vm396, %v395, 0
        %403 = vmatprep.subr.bf16.mxu0 0
        %404 = vmatpush1.bf16.xpose.msra.mxu0 %v401
        %405 = vmatprep.subr.bf16.mxu0 0
        %406 = vmatpush1.bf16.xpose.msra.mxu0 0
        %407 = vmatprep.subr.bf16.mxu0 0
        %408 = vmatpush1.bf16.xpose.msra.mxu0 0
        %409 = vmatprep.subr.bf16.mxu0 0
        %410 = vmatpush1.bf16.xpose.msra.mxu0 0
        %411 = vmatprep.subr.bf16.mxu0 0
        %412 = vmatpush1.bf16.xpose.msra.mxu0 0
        %413 = vmatprep.subr.bf16.mxu0 0
        %414 = vmatpush1.bf16.xpose.msra.mxu0 0
        %415 = vmatprep.subr.bf16.mxu0 0
        %416 = vmatpush1.bf16.xpose.msra.mxu0 0
        %417 = vmatprep.subr.bf16.mxu0 0
        %418 = vmatpush1.bf16.xpose.msra.mxu0 0
        %419 = vmatprep.subr.bf16.mxu0 0
        %420 = vmatpush1.bf16.xpose.msra.mxu0 0
        %421 = vmatprep.subr.bf16.mxu0 0
        %422 = vmatpush1.bf16.xpose.msra.mxu0 0
        %423 = vmatprep.subr.bf16.mxu0 0
        %424 = vmatpush1.bf16.xpose.msra.mxu0 0
        %425 = vmatprep.subr.bf16.mxu0 0
        %426 = vmatpush1.bf16.xpose.msra.mxu0 0
        %427 = vmatprep.subr.bf16.mxu0 0
        %428 = vmatpush1.bf16.xpose.msra.mxu0 0
        %429 = vmatprep.subr.bf16.mxu0 0
        %430 = vmatpush1.bf16.xpose.msra.mxu0 0
        %431 = vmatprep.subr.bf16.mxu0 0
        %432 = vmatpush1.bf16.xpose.msra.mxu0 0
        %433 = vmatprep.subr.bf16.mxu0 0
        %434 = vmatpush1.bf16.xpose.msra.mxu0 0
        %435 = vmatprep.mubr.bf16.mxu0 0
        %436 = vmatmul.mubr.bf16.gmra.mrb[0].mxu0 %v398
        %v437 = vpop.f32.mrb[0].mxu0
        %v438 = vadd.f32 0.0, %v437
        %v439 = vpop.f32.mrb[0].mxu0
        %v440 = vpop.f32.mrb[0].mxu0
        %v441 = vadd.f32 0.0, %v440
        %v442 = vpop.f32.mrb[0].mxu0
        %443 = vdwg.mxu0
        %vm444 = vcmask 130048
        %v445 = vsel %vm444, %v438, -inf
        %446 = vmax.xlane.f32.xlu0 %v445
        %v447 = vpop.xlane.xlu0 %446
        %v448 = vsel %vm444, %v441, -inf
        %449 = vmax.xlane.f32.xlu0 %v448
        %v450 = vpop.xlane.xlu0 %449
        %v451 = vsub.f32 %v438, %v447
        %v452 = vsub.f32 %v441, %v450
        %v453 = vmul.f32 %v451, 1.442695
        %v454 = vpow.pop %v453
        %v455 = vmul.f32 %v452, 1.442695
        %v456 = vpow.pop %v455
        %v457 = vsel %vm444, %v454, 0.0
        %458 = vadd.xlane.f32.xlu0 %v457
        %v459 = vpop.xlane.xlu0 %458
        %v460 = vsel %vm444, %v456, 0.0
        %461 = vadd.xlane.f32.xlu0 %v460
        %v462 = vpop.xlane.xlu0 %461
        %v463 = vpack.c.bf16 %v456, %v454
        %v465 = vsel %vm444, %v463, 0
        %467 = vmatprep.subr.bf16.mxu0 0
        %468 = vmatpush1.bf16.msra.mxu0 %v392
        %469 = vmatprep.subr.bf16.mxu0 0
        %470 = vmatpush1.bf16.msra.mxu0 0
        %471 = vmatprep.subr.bf16.mxu0 0
        %472 = vmatpush1.bf16.msra.mxu0 0
        %473 = vmatprep.subr.bf16.mxu0 0
        %474 = vmatpush1.bf16.msra.mxu0 0
        %475 = vmatprep.subr.bf16.mxu0 0
        %476 = vmatpush1.bf16.msra.mxu0 0
        %477 = vmatprep.subr.bf16.mxu0 0
        %478 = vmatpush1.bf16.msra.mxu0 0
        %479 = vmatprep.subr.bf16.mxu0 0
        %480 = vmatpush1.bf16.msra.mxu0 0
        %481 = vmatprep.subr.bf16.mxu0 0
        %482 = vmatpush1.bf16.msra.mxu0 0
        %483 = vmatprep.subr.bf16.mxu0 0
        %484 = vmatpush1.bf16.msra.mxu0 0
        %485 = vmatprep.subr.bf16.mxu0 0
        %486 = vmatpush1.bf16.msra.mxu0 0
        %487 = vmatprep.subr.bf16.mxu0 0
        %488 = vmatpush1.bf16.msra.mxu0 0
        %489 = vmatprep.subr.bf16.mxu0 0
        %490 = vmatpush1.bf16.msra.mxu0 0
        %491 = vmatprep.subr.bf16.mxu0 0
        %492 = vmatpush1.bf16.msra.mxu0 0
        %493 = vmatprep.subr.bf16.mxu0 0
        %494 = vmatpush1.bf16.msra.mxu0 0
        %495 = vmatprep.subr.bf16.mxu0 0
        %496 = vmatpush1.bf16.msra.mxu0 0
        %497 = vmatprep.subr.bf16.mxu0 0
        %498 = vmatpush1.bf16.msra.mxu0 0
        %499 = vmatprep.mubr.bf16.mxu0 0
        %500 = vmatmul.mubr.bf16.gmra.mrb[0].mxu0 %v465
        %v501 = vpop.f32.mrb[0].mxu0
        %v502 = vadd.f32 0.0, %v501
        %v503 = vpop.f32.mrb[0].mxu0
        %v504 = vpop.f32.mrb[0].mxu0
        %v505 = vadd.f32 0.0, %v504
        %v506 = vpop.f32.mrb[0].mxu0
        %507 = vdwg.mxu0
        %v508 = vrcp.pop %v459
        %v509 = vrcp.pop %v462
        %v510 = vmul.f32 %v502, %v508
        %v511 = vmul.f32 %v505, %v509
        %512 = vst.msk [vmem:[#allocation3] sm:$0xff] %vm396, %v510
        %513 = vst.msk [vmem:[#allocation3 + $0x8] sm:$0xff] %vm396, %v511
        %v514 = vld [vmem:[#allocation2] sm:$0xff]
        %v515 = vld [vmem:[#allocation2 + $0x10] sm:$0xff]
        %v516 = vpack.c.bf16 %v515, %v514
        %v517 = vld [vmem:[#allocation2 + $0x8] sm:$0xff]
        %v518 = vld [vmem:[#allocation2 + $0x18] sm:$0xff]
        %v519 = vpack.c.bf16 %v518, %v517
        %521 = vrot.lane.b32.xlu0 %v516, 120
        %v522 = vpop.permute.xlu0 %521
        %523 = vrot.lane.b32.xlu0 %v516, 56
        %v524 = vpop.permute.xlu0 %523
        %v526 = vsel %vm396, %v522, 0
        %v529 = vsel %vm396, %v524, 0
        %531 = vmatprep.subr.bf16.mxu0 0
        %532 = vmatpush1.bf16.xpose.msra.mxu0 %v529
        %533 = vmatprep.subr.bf16.mxu0 0
        %534 = vmatpush1.bf16.xpose.msra.mxu0 0
        %535 = vmatprep.subr.bf16.mxu0 0
        %536 = vmatpush1.bf16.xpose.msra.mxu0 0
        %537 = vmatprep.subr.bf16.mxu0 0
        %538 = vmatpush1.bf16.xpose.msra.mxu0 0
        %539 = vmatprep.subr.bf16.mxu0 0
        %540 = vmatpush1.bf16.xpose.msra.mxu0 0
        %541 = vmatprep.subr.bf16.mxu0 0
        %542 = vmatpush1.bf16.xpose.msra.mxu0 0
        %543 = vmatprep.subr.bf16.mxu0 0
        %544 = vmatpush1.bf16.xpose.msra.mxu0 0
        %545 = vmatprep.subr.bf16.mxu0 0
        %546 = vmatpush1.bf16.xpose.msra.mxu0 0
        %547 = vmatprep.subr.bf16.mxu0 0
        %548 = vmatpush1.bf16.xpose.msra.mxu0 0
        %549 = vmatprep.subr.bf16.mxu0 0
        %550 = vmatpush1.bf16.xpose.msra.mxu0 0
        %551 = vmatprep.subr.bf16.mxu0 0
        %552 = vmatpush1.bf16.xpose.msra.mxu0 0
        %553 = vmatprep.subr.bf16.mxu0 0
        %554 = vmatpush1.bf16.xpose.msra.mxu0 0
        %555 = vmatprep.subr.bf16.mxu0 0
        %556 = vmatpush1.bf16.xpose.msra.mxu0 0
        %557 = vmatprep.subr.bf16.mxu0 0
        %558 = vmatpush1.bf16.xpose.msra.mxu0 0
        %559 = vmatprep.subr.bf16.mxu0 0
        %560 = vmatpush1.bf16.xpose.msra.mxu0 0
        %561 = vmatprep.subr.bf16.mxu0 0
        %562 = vmatpush1.bf16.xpose.msra.mxu0 0
        %563 = vmatprep.mubr.bf16.mxu0 0
        %564 = vmatmul.mubr.bf16.gmra.mrb[0].mxu0 %v526
        %v565 = vpop.f32.mrb[0].mxu0
        %v566 = vadd.f32 0.0, %v565
        %v567 = vpop.f32.mrb[0].mxu0
        %v568 = vpop.f32.mrb[0].mxu0
        %v569 = vadd.f32 0.0, %v568
        %v570 = vpop.f32.mrb[0].mxu0
        %571 = vdwg.mxu0
        %v572 = vsel %vm444, %v566, -inf
        %573 = vmax.xlane.f32.xlu0 %v572
        %v574 = vpop.xlane.xlu0 %573
        %v575 = vsel %vm444, %v569, -inf
        %576 = vmax.xlane.f32.xlu0 %v575
        %v577 = vpop.xlane.xlu0 %576
        %v578 = vsub.f32 %v566, %v574
        %v579 = vsub.f32 %v569, %v577
        %v580 = vmul.f32 %v578, 1.442695
        %v581 = vpow.pop %v580
        %v582 = vmul.f32 %v579, 1.442695
        %v583 = vpow.pop %v582
        %v584 = vsel %vm444, %v581, 0.0
        %585 = vadd.xlane.f32.xlu0 %v584
        %v586 = vpop.xlane.xlu0 %585
        %v587 = vsel %vm444, %v583, 0.0
        %588 = vadd.xlane.f32.xlu0 %v587
        %v589 = vpop.xlane.xlu0 %588
        %v590 = vpack.c.bf16 %v583, %v581
        %592 = vrot.lane.b32.xlu0 %v519, 120
        %v593 = vpop.permute.xlu0 %592
        %v596 = vsel %vm444, %v590, 0
        %598 = vmatprep.subr.bf16.mxu0 0
        %599 = vmatpush1.bf16.msra.mxu0 %v593
        %600 = vmatprep.subr.bf16.mxu0 0
        %601 = vmatpush1.bf16.msra.mxu0 0
        %602 = vmatprep.subr.bf16.mxu0 0
        %603 = vmatpush1.bf16.msra.mxu0 0
        %604 = vmatprep.subr.bf16.mxu0 0
        %605 = vmatpush1.bf16.msra.mxu0 0
        %606 = vmatprep.subr.bf16.mxu0 0
        %607 = vmatpush1.bf16.msra.mxu0 0
        %608 = vmatprep.subr.bf16.mxu0 0
        %609 = vmatpush1.bf16.msra.mxu0 0
        %610 = vmatprep.subr.bf16.mxu0 0
        %611 = vmatpush1.bf16.msra.mxu0 0
        %612 = vmatprep.subr.bf16.mxu0 0
        %613 = vmatpush1.bf16.msra.mxu0 0
        %614 = vmatprep.subr.bf16.mxu0 0
        %615 = vmatpush1.bf16.msra.mxu0 0
        %616 = vmatprep.subr.bf16.mxu0 0
        %617 = vmatpush1.bf16.msra.mxu0 0
        %618 = vmatprep.subr.bf16.mxu0 0
        %619 = vmatpush1.bf16.msra.mxu0 0
        %620 = vmatprep.subr.bf16.mxu0 0
        %621 = vmatpush1.bf16.msra.mxu0 0
        %622 = vmatprep.subr.bf16.mxu0 0
        %623 = vmatpush1.bf16.msra.mxu0 0
        %624 = vmatprep.subr.bf16.mxu0 0
        %625 = vmatpush1.bf16.msra.mxu0 0
        %626 = vmatprep.subr.bf16.mxu0 0
        %627 = vmatpush1.bf16.msra.mxu0 0
        %628 = vmatprep.subr.bf16.mxu0 0
        %629 = vmatpush1.bf16.msra.mxu0 0
        %630 = vmatprep.mubr.bf16.mxu0 0
        %631 = vmatmul.mubr.bf16.gmra.mrb[0].mxu0 %v596
        %v632 = vpop.f32.mrb[0].mxu0
        %v633 = vadd.f32 0.0, %v632
        %v634 = vpop.f32.mrb[0].mxu0
        %v635 = vpop.f32.mrb[0].mxu0
        %v636 = vadd.f32 0.0, %v635
        %v637 = vpop.f32.mrb[0].mxu0
        %638 = vdwg.mxu0
        %v639 = vrcp.pop %v586
        %v640 = vrcp.pop %v589
        %v641 = vmul.f32 %v633, %v639
        %v642 = vmul.f32 %v636, %v640
        %645 = vrot.lane.b32.xlu0 %v641, 8
        %v646 = vpop.permute.xlu0 %645
        %647 = vrot.lane.b32.xlu0 %v642, 8
        %v648 = vpop.permute.xlu0 %647
        %vm651 = vcmask 130112
        %652 = vst.msk [vmem:[#allocation3] sm:$0xff] %vm651, %v646
        %653 = vst.msk [vmem:[#allocation3 + $0x8] sm:$0xff] %vm651, %v648
        %v654 = vld [vmem:[#allocation2] sm:$0xff]
        %v655 = vld [vmem:[#allocation2 + $0x10] sm:$0xff]
        %v656 = vpack.c.bf16 %v655, %v654
        %v657 = vld [vmem:[#allocation2 + $0x8] sm:$0xff]
        %v658 = vld [vmem:[#allocation2 + $0x18] sm:$0xff]
        %v659 = vpack.c.bf16 %v658, %v657
        %661 = vrot.lane.b32.xlu0 %v656, 112
        %v662 = vpop.permute.xlu0 %661
        %663 = vrot.lane.b32.xlu0 %v656, 48
        %v664 = vpop.permute.xlu0 %663
        %v666 = vsel %vm396, %v662, 0
        %v669 = vsel %vm396, %v664, 0
        %671 = vmatprep.subr.bf16.mxu0 0
        %672 = vmatpush1.bf16.xpose.msra.mxu0 %v669
        %673 = vmatprep.subr.bf16.mxu0 0
        %674 = vmatpush1.bf16.xpose.msra.mxu0 0
        %675 = vmatprep.subr.bf16.mxu0 0
        %676 = vmatpush1.bf16.xpose.msra.mxu0 0
        %677 = vmatprep.subr.bf16.mxu0 0
        %678 = vmatpush1.bf16.xpose.msra.mxu0 0
        %679 = vmatprep.subr.bf16.mxu0 0
        %680 = vmatpush1.bf16.xpose.msra.mxu0 0
        %681 = vmatprep.subr.bf16.mxu0 0
        %682 = vmatpush1.bf16.xpose.msra.mxu0 0
        %683 = vmatprep.subr.bf16.mxu0 0
        %684 = vmatpush1.bf16.xpose.msra.mxu0 0
        %685 = vmatprep.subr.bf16.mxu0 0
        %686 = vmatpush1.bf16.xpose.msra.mxu0 0
        %687 = vmatprep.subr.bf16.mxu0 0
        %688 = vmatpush1.bf16.xpose.msra.mxu0 0
        %689 = vmatprep.subr.bf16.mxu0 0
        %690 = vmatpush1.bf16.xpose.msra.mxu0 0
        %691 = vmatprep.subr.bf16.mxu0 0
        %692 = vmatpush1.bf16.xpose.msra.mxu0 0
        %693 = vmatprep.subr.bf16.mxu0 0
        %694 = vmatpush1.bf16.xpose.msra.mxu0 0
        %695 = vmatprep.subr.bf16.mxu0 0
        %696 = vmatpush1.bf16.xpose.msra.mxu0 0
        %697 = vmatprep.subr.bf16.mxu0 0
        %698 = vmatpush1.bf16.xpose.msra.mxu0 0
        %699 = vmatprep.subr.bf16.mxu0 0
        %700 = vmatpush1.bf16.xpose.msra.mxu0 0
        %701 = vmatprep.subr.bf16.mxu0 0
        %702 = vmatpush1.bf16.xpose.msra.mxu0 0
        %703 = vmatprep.mubr.bf16.mxu0 0
        %704 = vmatmul.mubr.bf16.gmra.mrb[0].mxu0 %v666
        %v705 = vpop.f32.mrb[0].mxu0
        %v706 = vadd.f32 0.0, %v705
        %v707 = vpop.f32.mrb[0].mxu0
        %v708 = vpop.f32.mrb[0].mxu0
        %v709 = vadd.f32 0.0, %v708
        %v710 = vpop.f32.mrb[0].mxu0
        %711 = vdwg.mxu0
        %v712 = vsel %vm444, %v706, -inf
        %713 = vmax.xlane.f32.xlu0 %v712
        %v714 = vpop.xlane.xlu0 %713
        %v715 = vsel %vm444, %v709, -inf
        %716 = vmax.xlane.f32.xlu0 %v715
        %v717 = vpop.xlane.xlu0 %716
        %v718 = vsub.f32 %v706, %v714
        %v719 = vsub.f32 %v709, %v717
        %v720 = vmul.f32 %v718, 1.442695
        %v721 = vpow.pop %v720
        %v722 = vmul.f32 %v719, 1.442695
        %v723 = vpow.pop %v722
        %v724 = vsel %vm444, %v721, 0.0
        %725 = vadd.xlane.f32.xlu0 %v724
        %v726 = vpop.xlane.xlu0 %725
        %v727 = vsel %vm444, %v723, 0.0
        %728 = vadd.xlane.f32.xlu0 %v727
        %v729 = vpop.xlane.xlu0 %728
        %v730 = vpack.c.bf16 %v723, %v721
        %732 = vrot.lane.b32.xlu0 %v659, 112
        %v733 = vpop.permute.xlu0 %732
        %v736 = vsel %vm444, %v730, 0
        %738 = vmatprep.subr.bf16.mxu0 0
        %739 = vmatpush1.bf16.msra.mxu0 %v733
        %740 = vmatprep.subr.bf16.mxu0 0
        %741 = vmatpush1.bf16.msra.mxu0 0
        %742 = vmatprep.subr.bf16.mxu0 0
        %743 = vmatpush1.bf16.msra.mxu0 0
        %744 = vmatprep.subr.bf16.mxu0 0
        %745 = vmatpush1.bf16.msra.mxu0 0
        %746 = vmatprep.subr.bf16.mxu0 0
        %747 = vmatpush1.bf16.msra.mxu0 0
        %748 = vmatprep.subr.bf16.mxu0 0
        %749 = vmatpush1.bf16.msra.mxu0 0
        %750 = vmatprep.subr.bf16.mxu0 0
        %751 = vmatpush1.bf16.msra.mxu0 0
        %752 = vmatprep.subr.bf16.mxu0 0
        %753 = vmatpush1.bf16.msra.mxu0 0
        %754 = vmatprep.subr.bf16.mxu0 0
        %755 = vmatpush1.bf16.msra.mxu0 0
        %756 = vmatprep.subr.bf16.mxu0 0
        %757 = vmatpush1.bf16.msra.mxu0 0
        %758 = vmatprep.subr.bf16.mxu0 0
        %759 = vmatpush1.bf16.msra.mxu0 0
        %760 = vmatprep.subr.bf16.mxu0 0
        %761 = vmatpush1.bf16.msra.mxu0 0
        %762 = vmatprep.subr.bf16.mxu0 0
        %763 = vmatpush1.bf16.msra.mxu0 0
        %764 = vmatprep.subr.bf16.mxu0 0
        %765 = vmatpush1.bf16.msra.mxu0 0
        %766 = vmatprep.subr.bf16.mxu0 0
        %767 = vmatpush1.bf16.msra.mxu0 0
        %768 = vmatprep.subr.bf16.mxu0 0
        %769 = vmatpush1.bf16.msra.mxu0 0
        %770 = vmatprep.mubr.bf16.mxu0 0
        %771 = vmatmul.mubr.bf16.gmra.mrb[0].mxu0 %v736
        %v772 = vpop.f32.mrb[0].mxu0
        %v773 = vadd.f32 0.0, %v772
        %v774 = vpop.f32.mrb[0].mxu0
        %v775 = vpop.f32.mrb[0].mxu0
        %v776 = vadd.f32 0.0, %v775
        %v777 = vpop.f32.mrb[0].mxu0
        %778 = vdwg.mxu0
        %v779 = vrcp.pop %v726
        %v780 = vrcp.pop %v729
        %v781 = vmul.f32 %v773, %v779
        %v782 = vmul.f32 %v776, %v780
        %785 = vrot.lane.b32.xlu0 %v781, 16
        %v786 = vpop.permute.xlu0 %785
        %787 = vrot.lane.b32.xlu0 %v782, 16
        %v788 = vpop.permute.xlu0 %787
        %vm791 = vcmask 195712
        %792 = vst.msk [vmem:[#allocation3] sm:$0xff] %vm791, %v786
        %793 = vst.msk [vmem:[#allocation3 + $0x8] sm:$0xff] %vm791, %v788
        %v794 = vld [vmem:[#allocation2] sm:$0xff]
        %v795 = vld [vmem:[#allocation2 + $0x10] sm:$0xff]
        %v796 = vpack.c.bf16 %v795, %v794
        %v797 = vld [vmem:[#allocation2 + $0x8] sm:$0xff]
        %v798 = vld [vmem:[#allocation2 + $0x18] sm:$0xff]
        %v799 = vpack.c.bf16 %v798, %v797
        %801 = vrot.lane.b32.xlu0 %v796, 104
        %v802 = vpop.permute.xlu0 %801
        %803 = vrot.lane.b32.xlu0 %v796, 40
        %v804 = vpop.permute.xlu0 %803
        %v806 = vsel %vm396, %v802, 0
        %v809 = vsel %vm396, %v804, 0
        %811 = vmatprep.subr.bf16.mxu0 0
        %812 = vmatpush1.bf16.xpose.msra.mxu0 %v809
        %813 = vmatprep.subr.bf16.mxu0 0
        %814 = vmatpush1.bf16.xpose.msra.mxu0 0
        %815 = vmatprep.subr.bf16.mxu0 0
        %816 = vmatpush1.bf16.xpose.msra.mxu0 0
        %817 = vmatprep.subr.bf16.mxu0 0
        %818 = vmatpush1.bf16.xpose.msra.mxu0 0
        %819 = vmatprep.subr.bf16.mxu0 0
        %820 = vmatpush1.bf16.xpose.msra.mxu0 0
        %821 = vmatprep.subr.bf16.mxu0 0
        %822 = vmatpush1.bf16.xpose.msra.mxu0 0
        %823 = vmatprep.subr.bf16.mxu0 0
        %824 = vmatpush1.bf16.xpose.msra.mxu0 0
        %825 = vmatprep.subr.bf16.mxu0 0
        %826 = vmatpush1.bf16.xpose.msra.mxu0 0
        %827 = vmatprep.subr.bf16.mxu0 0
        %828 = vmatpush1.bf16.xpose.msra.mxu0 0
        %829 = vmatprep.subr.bf16.mxu0 0
        %830 = vmatpush1.bf16.xpose.msra.mxu0 0
        %831 = vmatprep.subr.bf16.mxu0 0
        %832 = vmatpush1.bf16.xpose.msra.mxu0 0
        %833 = vmatprep.subr.bf16.mxu0 0
        %834 = vmatpush1.bf16.xpose.msra.mxu0 0
        %835 = vmatprep.subr.bf16.mxu0 0
        %836 = vmatpush1.bf16.xpose.msra.mxu0 0
        %837 = vmatprep.subr.bf16.mxu0 0
        %838 = vmatpush1.bf16.xpose.msra.mxu0 0
        %839 = vmatprep.subr.bf16.mxu0 0
        %840 = vmatpush1.bf16.xpose.msra.mxu0 0
        %841 = vmatprep.subr.bf16.mxu0 0
        %842 = vmatpush1.bf16.xpose.msra.mxu0 0
        %843 = vmatprep.mubr.bf16.mxu0 0
        %844 = vmatmul.mubr.bf16.gmra.mrb[0].mxu0 %v806
        %v845 = vpop.f32.mrb[0].mxu0
        %v846 = vadd.f32 0.0, %v845
        %v847 = vpop.f32.mrb[0].mxu0
        %v848 = vpop.f32.mrb[0].mxu0
        %v849 = vadd.f32 0.0, %v848
        %v850 = vpop.f32.mrb[0].mxu0
        %851 = vdwg.mxu0
        %v852 = vsel %vm444, %v846, -inf
        %853 = vmax.xlane.f32.xlu0 %v852
        %v854 = vpop.xlane.xlu0 %853
        %v855 = vsel %vm444, %v849, -inf
        %856 = vmax.xlane.f32.xlu0 %v855
        %v857 = vpop.xlane.xlu0 %856
        %v858 = vsub.f32 %v846, %v854
        %v859 = vsub.f32 %v849, %v857
        %v860 = vmul.f32 %v858, 1.442695
        %v861 = vpow.pop %v860
        %v862 = vmul.f32 %v859, 1.442695
        %v863 = vpow.pop %v862
        %v864 = vsel %vm444, %v861, 0.0
        %865 = vadd.xlane.f32.xlu0 %v864
        %v866 = vpop.xlane.xlu0 %865
        %v867 = vsel %vm444, %v863, 0.0
        %868 = vadd.xlane.f32.xlu0 %v867
        %v869 = vpop.xlane.xlu0 %868
        %v870 = vpack.c.bf16 %v863, %v861
        %872 = vrot.lane.b32.xlu0 %v799, 104
        %v873 = vpop.permute.xlu0 %872
        %v876 = vsel %vm444, %v870, 0
        %878 = vmatprep.subr.bf16.mxu0 0
        %879 = vmatpush1.bf16.msra.mxu0 %v873
        %880 = vmatprep.subr.bf16.mxu0 0
        %881 = vmatpush1.bf16.msra.mxu0 0
        %882 = vmatprep.subr.bf16.mxu0 0
        %883 = vmatpush1.bf16.msra.mxu0 0
        %884 = vmatprep.subr.bf16.mxu0 0
        %885 = vmatpush1.bf16.msra.mxu0 0
        %886 = vmatprep.subr.bf16.mxu0 0
        %887 = vmatpush1.bf16.msra.mxu0 0
        %888 = vmatprep.subr.bf16.mxu0 0
        %889 = vmatpush1.bf16.msra.mxu0 0
        %890 = vmatprep.subr.bf16.mxu0 0
        %891 = vmatpush1.bf16.msra.mxu0 0
        %892 = vmatprep.subr.bf16.mxu0 0
        %893 = vmatpush1.bf16.msra.mxu0 0
        %894 = vmatprep.subr.bf16.mxu0 0
        %895 = vmatpush1.bf16.msra.mxu0 0
        %896 = vmatprep.subr.bf16.mxu0 0
        %897 = vmatpush1.bf16.msra.mxu0 0
        %898 = vmatprep.subr.bf16.mxu0 0
        %899 = vmatpush1.bf16.msra.mxu0 0
        %900 = vmatprep.subr.bf16.mxu0 0
        %901 = vmatpush1.bf16.msra.mxu0 0
        %902 = vmatprep.subr.bf16.mxu0 0
        %903 = vmatpush1.bf16.msra.mxu0 0
        %904 = vmatprep.subr.bf16.mxu0 0
        %905 = vmatpush1.bf16.msra.mxu0 0
        %906 = vmatprep.subr.bf16.mxu0 0
        %907 = vmatpush1.bf16.msra.mxu0 0
        %908 = vmatprep.subr.bf16.mxu0 0
        %909 = vmatpush1.bf16.msra.mxu0 0
        %910 = vmatprep.mubr.bf16.mxu0 0
        %911 = vmatmul.mubr.bf16.gmra.mrb[0].mxu0 %v876
        %v912 = vpop.f32.mrb[0].mxu0
        %v913 = vadd.f32 0.0, %v912
        %v914 = vpop.f32.mrb[0].mxu0
        %v915 = vpop.f32.mrb[0].mxu0
        %v916 = vadd.f32 0.0, %v915
        %v917 = vpop.f32.mrb[0].mxu0
        %918 = vdwg.mxu0
        %v919 = vrcp.pop %v866
        %v920 = vrcp.pop %v869
        %v921 = vmul.f32 %v913, %v919
        %v922 = vmul.f32 %v916, %v920
        %925 = vrot.lane.b32.xlu0 %v921, 24
        %v926 = vpop.permute.xlu0 %925
        %927 = vrot.lane.b32.xlu0 %v922, 24
        %v928 = vpop.permute.xlu0 %927
        %vm931 = vcmask 261312
        %932 = vst.msk [vmem:[#allocation3] sm:$0xff] %vm931, %v926
        %933 = vst.msk [vmem:[#allocation3 + $0x8] sm:$0xff] %vm931, %v928
        %v934 = vld [vmem:[#allocation2] sm:$0xff]
        %v935 = vld [vmem:[#allocation2 + $0x10] sm:$0xff]
        %v936 = vpack.c.bf16 %v935, %v934
        %v937 = vld [vmem:[#allocation2 + $0x8] sm:$0xff]
        %v938 = vld [vmem:[#allocation2 + $0x18] sm:$0xff]
        %v939 = vpack.c.bf16 %v938, %v937
        %941 = vrot.lane.b32.xlu0 %v936, 96
        %v942 = vpop.permute.xlu0 %941
        %943 = vrot.lane.b32.xlu0 %v936, 32
        %v944 = vpop.permute.xlu0 %943
        %v946 = vsel %vm396, %v942, 0
        %v949 = vsel %vm396, %v944, 0
        %951 = vmatprep.subr.bf16.mxu0 0
        %952 = vmatpush1.bf16.xpose.msra.mxu0 %v949
        %953 = vmatprep.subr.bf16.mxu0 0
        %954 = vmatpush1.bf16.xpose.msra.mxu0 0
        %955 = vmatprep.subr.bf16.mxu0 0
        %956 = vmatpush1.bf16.xpose.msra.mxu0 0
        %957 = vmatprep.subr.bf16.mxu0 0
        %958 = vmatpush1.bf16.xpose.msra.mxu0 0
        %959 = vmatprep.subr.bf16.mxu0 0
        %960 = vmatpush1.bf16.xpose.msra.mxu0 0
        %961 = vmatprep.subr.bf16.mxu0 0
        %962 = vmatpush1.bf16.xpose.msra.mxu0 0
        %963 = vmatprep.subr.bf16.mxu0 0
        %964 = vmatpush1.bf16.xpose.msra.mxu0 0
        %965 = vmatprep.subr.bf16.mxu0 0
        %966 = vmatpush1.bf16.xpose.msra.mxu0 0
        %967 = vmatprep.subr.bf16.mxu0 0
        %968 = vmatpush1.bf16.xpose.msra.mxu0 0
        %969 = vmatprep.subr.bf16.mxu0 0
        %970 = vmatpush1.bf16.xpose.msra.mxu0 0
        %971 = vmatprep.subr.bf16.mxu0 0
        %972 = vmatpush1.bf16.xpose.msra.mxu0 0
        %973 = vmatprep.subr.bf16.mxu0 0
        %974 = vmatpush1.bf16.xpose.msra.mxu0 0
        %975 = vmatprep.subr.bf16.mxu0 0
        %976 = vmatpush1.bf16.xpose.msra.mxu0 0
        %977 = vmatprep.subr.bf16.mxu0 0
        %978 = vmatpush1.bf16.xpose.msra.mxu0 0
        %979 = vmatprep.subr.bf16.mxu0 0
        %980 = vmatpush1.bf16.xpose.msra.mxu0 0
        %981 = vmatprep.subr.bf16.mxu0 0
        %982 = vmatpush1.bf16.xpose.msra.mxu0 0
        %983 = vmatprep.mubr.bf16.mxu0 0
        %984 = vmatmul.mubr.bf16.gmra.mrb[0].mxu0 %v946
        %v985 = vpop.f32.mrb[0].mxu0
        %v986 = vadd.f32 0.0, %v985
        %v987 = vpop.f32.mrb[0].mxu0
        %v988 = vpop.f32.mrb[0].mxu0
        %v989 = vadd.f32 0.0, %v988
        %v990 = vpop.f32.mrb[0].mxu0
        %991 = vdwg.mxu0
        %v992 = vsel %vm444, %v986, -inf
        %993 = vmax.xlane.f32.xlu0 %v992
        %v994 = vpop.xlane.xlu0 %993
        %v995 = vsel %vm444, %v989, -inf
        %996 = vmax.xlane.f32.xlu0 %v995
        %v997 = vpop.xlane.xlu0 %996
        %v998 = vsub.f32 %v986, %v994
        %v999 = vsub.f32 %v989, %v997
        %v1000 = vmul.f32 %v998, 1.442695
        %v1001 = vpow.pop %v1000
        %v1002 = vmul.f32 %v999, 1.442695
        %v1003 = vpow.pop %v1002
        %v1004 = vsel %vm444, %v1001, 0.0
        %1005 = vadd.xlane.f32.xlu0 %v1004
        %v1006 = vpop.xlane.xlu0 %1005
        %v1007 = vsel %vm444, %v1003, 0.0
        %1008 = vadd.xlane.f32.xlu0 %v1007
        %v1009 = vpop.xlane.xlu0 %1008
        %v1010 = vpack.c.bf16 %v1003, %v1001
        %1012 = vrot.lane.b32.xlu0 %v939, 96
        %v1013 = vpop.permute.xlu0 %1012
        %v1016 = vsel %vm444, %v1010, 0
        %1018 = vmatprep.subr.bf16.mxu0 0
        %1019 = vmatpush1.bf16.msra.mxu0 %v1013
        %1020 = vmatprep.subr.bf16.mxu0 0
        %1021 = vmatpush1.bf16.msra.mxu0 0
        %1022 = vmatprep.subr.bf16.mxu0 0
        %1023 = vmatpush1.bf16.msra.mxu0 0
        %1024 = vmatprep.subr.bf16.mxu0 0
        %1025 = vmatpush1.bf16.msra.mxu0 0
        %1026 = vmatprep.subr.bf16.mxu0 0
        %1027 = vmatpush1.bf16.msra.mxu0 0
        %1028 = vmatprep.subr.bf16.mxu0 0
        %1029 = vmatpush1.bf16.msra.mxu0 0
        %1030 = vmatprep.subr.bf16.mxu0 0
        %1031 = vmatpush1.bf16.msra.mxu0 0
        %1032 = vmatprep.subr.bf16.mxu0 0
        %1033 = vmatpush1.bf16.msra.mxu0 0
        %1034 = vmatprep.subr.bf16.mxu0 0
        %1035 = vmatpush1.bf16.msra.mxu0 0
        %1036 = vmatprep.subr.bf16.mxu0 0
        %1037 = vmatpush1.bf16.msra.mxu0 0
        %1038 = vmatprep.subr.bf16.mxu0 0
        %1039 = vmatpush1.bf16.msra.mxu0 0
        %1040 = vmatprep.subr.bf16.mxu0 0
        %1041 = vmatpush1.bf16.msra.mxu0 0
        %1042 = vmatprep.subr.bf16.mxu0 0
        %1043 = vmatpush1.bf16.msra.mxu0 0
        %1044 = vmatprep.subr.bf16.mxu0 0
        %1045 = vmatpush1.bf16.msra.mxu0 0
        %1046 = vmatprep.subr.bf16.mxu0 0
        %1047 = vmatpush1.bf16.msra.mxu0 0
        %1048 = vmatprep.subr.bf16.mxu0 0
        %1049 = vmatpush1.bf16.msra.mxu0 0
        %1050 = vmatprep.mubr.bf16.mxu0 0
        %1051 = vmatmul.mubr.bf16.gmra.mrb[0].mxu0 %v1016
        %v1052 = vpop.f32.mrb[0].mxu0
        %v1053 = vadd.f32 0.0, %v1052
        %v1054 = vpop.f32.mrb[0].mxu0
        %v1055 = vpop.f32.mrb[0].mxu0
        %v1056 = vadd.f32 0.0, %v1055
        %v1057 = vpop.f32.mrb[0].mxu0
        %1058 = vdwg.mxu0
        %v1059 = vrcp.pop %v1006
        %v1060 = vrcp.pop %v1009
        %v1061 = vmul.f32 %v1053, %v1059
        %v1062 = vmul.f32 %v1056, %v1060
        %1065 = vrot.lane.b32.xlu0 %v1061, 32
        %v1066 = vpop.permute.xlu0 %1065
        %1067 = vrot.lane.b32.xlu0 %v1062, 32
        %v1068 = vpop.permute.xlu0 %1067
        %vm1071 = vcmask 326912
        %1072 = vst.msk [vmem:[#allocation3] sm:$0xff] %vm1071, %v1066
        %1073 = vst.msk [vmem:[#allocation3 + $0x8] sm:$0xff] %vm1071, %v1068
        %v1074 = vld [vmem:[#allocation2] sm:$0xff]
        %v1075 = vld [vmem:[#allocation2 + $0x10] sm:$0xff]
        %v1076 = vpack.c.bf16 %v1075, %v1074
        %v1077 = vld [vmem:[#allocation2 + $0x8] sm:$0xff]
        %v1078 = vld [vmem:[#allocation2 + $0x18] sm:$0xff]
        %v1079 = vpack.c.bf16 %v1078, %v1077
        %1081 = vrot.lane.b32.xlu0 %v1076, 88
        %v1082 = vpop.permute.xlu0 %1081
        %1083 = vrot.lane.b32.xlu0 %v1076, 24
        %v1084 = vpop.permute.xlu0 %1083
        %v1086 = vsel %vm396, %v1082, 0
        %v1089 = vsel %vm396, %v1084, 0
        %1091 = vmatprep.subr.bf16.mxu0 0
        %1092 = vmatpush1.bf16.xpose.msra.mxu0 %v1089
        %1093 = vmatprep.subr.bf16.mxu0 0
        %1094 = vmatpush1.bf16.xpose.msra.mxu0 0
        %1095 = vmatprep.subr.bf16.mxu0 0
        %1096 = vmatpush1.bf16.xpose.msra.mxu0 0
        %1097 = vmatprep.subr.bf16.mxu0 0
        %1098 = vmatpush1.bf16.xpose.msra.mxu0 0
        %1099 = vmatprep.subr.bf16.mxu0 0
        %1100 = vmatpush1.bf16.xpose.msra.mxu0 0
        %1101 = vmatprep.subr.bf16.mxu0 0
        %1102 = vmatpush1.bf16.xpose.msra.mxu0 0
        %1103 = vmatprep.subr.bf16.mxu0 0
        %1104 = vmatpush1.bf16.xpose.msra.mxu0 0
        %1105 = vmatprep.subr.bf16.mxu0 0
        %1106 = vmatpush1.bf16.xpose.msra.mxu0 0
        %1107 = vmatprep.subr.bf16.mxu0 0
        %1108 = vmatpush1.bf16.xpose.msra.mxu0 0
        %1109 = vmatprep.subr.bf16.mxu0 0
        %1110 = vmatpush1.bf16.xpose.msra.mxu0 0
        %1111 = vmatprep.subr.bf16.mxu0 0
        %1112 = vmatpush1.bf16.xpose.msra.mxu0 0
        %1113 = vmatprep.subr.bf16.mxu0 0
        %1114 = vmatpush1.bf16.xpose.msra.mxu0 0
        %1115 = vmatprep.subr.bf16.mxu0 0
        %1116 = vmatpush1.bf16.xpose.msra.mxu0 0
        %1117 = vmatprep.subr.bf16.mxu0 0
        %1118 = vmatpush1.bf16.xpose.msra.mxu0 0
        %1119 = vmatprep.subr.bf16.mxu0 0
        %1120 = vmatpush1.bf16.xpose.msra.mxu0 0
        %1121 = vmatprep.subr.bf16.mxu0 0
        %1122 = vmatpush1.bf16.xpose.msra.mxu0 0
        %1123 = vmatprep.mubr.bf16.mxu0 0
        %1124 = vmatmul.mubr.bf16.gmra.mrb[0].mxu0 %v1086
        %v1125 = vpop.f32.mrb[0].mxu0
        %v1126 = vadd.f32 0.0, %v1125
        %v1127 = vpop.f32.mrb[0].mxu0
        %v1128 = vpop.f32.mrb[0].mxu0
        %v1129 = vadd.f32 0.0, %v1128
        %v1130 = vpop.f32.mrb[0].mxu0
        %1131 = vdwg.mxu0
        %v1132 = vsel %vm444, %v1126, -inf
        %1133 = vmax.xlane.f32.xlu0 %v1132
        %v1134 = vpop.xlane.xlu0 %1133
        %v1135 = vsel %vm444, %v1129, -inf
        %1136 = vmax.xlane.f32.xlu0 %v1135
        %v1137 = vpop.xlane.xlu0 %1136
        %v1138 = vsub.f32 %v1126, %v1134
        %v1139 = vsub.f32 %v1129, %v1137
        %v1140 = vmul.f32 %v1138, 1.442695
        %v1141 = vpow.pop %v1140
        %v1142 = vmul.f32 %v1139, 1.442695
        %v1143 = vpow.pop %v1142
        %v1144 = vsel %vm444, %v1141, 0.0
        %1145 = vadd.xlane.f32.xlu0 %v1144
        %v1146 = vpop.xlane.xlu0 %1145
        %v1147 = vsel %vm444, %v1143, 0.0
        %1148 = vadd.xlane.f32.xlu0 %v1147
        %v1149 = vpop.xlane.xlu0 %1148
        %v1150 = vpack.c.bf16 %v1143, %v1141
        %1152 = vrot.lane.b32.xlu0 %v1079, 88
        %v1153 = vpop.permute.xlu0 %1152
        %v1156 = vsel %vm444, %v1150, 0
        %1158 = vmatprep.subr.bf16.mxu0 0
        %1159 = vmatpush1.bf16.msra.mxu0 %v1153
        %1160 = vmatprep.subr.bf16.mxu0 0
        %1161 = vmatpush1.bf16.msra.mxu0 0
        %1162 = vmatprep.subr.bf16.mxu0 0
        %1163 = vmatpush1.bf16.msra.mxu0 0
        %1164 = vmatprep.subr.bf16.mxu0 0
        %1165 = vmatpush1.bf16.msra.mxu0 0
        %1166 = vmatprep.subr.bf16.mxu0 0
        %1167 = vmatpush1.bf16.msra.mxu0 0
        %1168 = vmatprep.subr.bf16.mxu0 0
        %1169 = vmatpush1.bf16.msra.mxu0 0
        %1170 = vmatprep.subr.bf16.mxu0 0
        %1171 = vmatpush1.bf16.msra.mxu0 0
        %1172 = vmatprep.subr.bf16.mxu0 0
        %1173 = vmatpush1.bf16.msra.mxu0 0
        %1174 = vmatprep.subr.bf16.mxu0 0
        %1175 = vmatpush1.bf16.msra.mxu0 0
        %1176 = vmatprep.subr.bf16.mxu0 0
        %1177 = vmatpush1.bf16.msra.mxu0 0
        %1178 = vmatprep.subr.bf16.mxu0 0
        %1179 = vmatpush1.bf16.msra.mxu0 0
        %1180 = vmatprep.subr.bf16.mxu0 0
        %1181 = vmatpush1.bf16.msra.mxu0 0
        %1182 = vmatprep.subr.bf16.mxu0 0
        %1183 = vmatpush1.bf16.msra.mxu0 0
        %1184 = vmatprep.subr.bf16.mxu0 0
        %1185 = vmatpush1.bf16.msra.mxu0 0
        %1186 = vmatprep.subr.bf16.mxu0 0
        %1187 = vmatpush1.bf16.msra.mxu0 0
        %1188 = vmatprep.subr.bf16.mxu0 0
        %1189 = vmatpush1.bf16.msra.mxu0 0
        %1190 = vmatprep.mubr.bf16.mxu0 0
        %1191 = vmatmul.mubr.bf16.gmra.mrb[0].mxu0 %v1156
        %v1192 = vpop.f32.mrb[0].mxu0
        %v1193 = vadd.f32 0.0, %v1192
        %v1194 = vpop.f32.mrb[0].mxu0
        %v1195 = vpop.f32.mrb[0].mxu0
        %v1196 = vadd.f32 0.0, %v1195
        %v1197 = vpop.f32.mrb[0].mxu0
        %1198 = vdwg.mxu0
        %v1199 = vrcp.pop %v1146
        %v1200 = vrcp.pop %v1149
        %v1201 = vmul.f32 %v1193, %v1199
        %v1202 = vmul.f32 %v1196, %v1200
        %1205 = vrot.lane.b32.xlu0 %v1201, 40
        %v1206 = vpop.permute.xlu0 %1205
        %1207 = vrot.lane.b32.xlu0 %v1202, 40
        %v1208 = vpop.permute.xlu0 %1207
        %vm1211 = vcmask 392512
        %1212 = vst.msk [vmem:[#allocation3] sm:$0xff] %vm1211, %v1206
        %1213 = vst.msk [vmem:[#allocation3 + $0x8] sm:$0xff] %vm1211, %v1208
        %v1214 = vld [vmem:[#allocation2] sm:$0xff]
        %v1215 = vld [vmem:[#allocation2 + $0x10] sm:$0xff]
        %v1216 = vpack.c.bf16 %v1215, %v1214
        %v1217 = vld [vmem:[#allocation2 + $0x8] sm:$0xff]
        %v1218 = vld [vmem:[#allocation2 + $0x18] sm:$0xff]
        %v1219 = vpack.c.bf16 %v1218, %v1217
        %1221 = vrot.lane.b32.xlu0 %v1216, 80
        %v1222 = vpop.permute.xlu0 %1221
        %1223 = vrot.lane.b32.xlu0 %v1216, 16
        %v1224 = vpop.permute.xlu0 %1223
        %v1226 = vsel %vm396, %v1222, 0
        %v1229 = vsel %vm396, %v1224, 0
        %1231 = vmatprep.subr.bf16.mxu0 0
        %1232 = vmatpush1.bf16.xpose.msra.mxu0 %v1229
        %1233 = vmatprep.subr.bf16.mxu0 0
        %1234 = vmatpush1.bf16.xpose.msra.mxu0 0
        %1235 = vmatprep.subr.bf16.mxu0 0
        %1236 = vmatpush1.bf16.xpose.msra.mxu0 0
        %1237 = vmatprep.subr.bf16.mxu0 0
        %1238 = vmatpush1.bf16.xpose.msra.mxu0 0
        %1239 = vmatprep.subr.bf16.mxu0 0
        %1240 = vmatpush1.bf16.xpose.msra.mxu0 0
        %1241 = vmatprep.subr.bf16.mxu0 0
        %1242 = vmatpush1.bf16.xpose.msra.mxu0 0
        %1243 = vmatprep.subr.bf16.mxu0 0
        %1244 = vmatpush1.bf16.xpose.msra.mxu0 0
        %1245 = vmatprep.subr.bf16.mxu0 0
        %1246 = vmatpush1.bf16.xpose.msra.mxu0 0
        %1247 = vmatprep.subr.bf16.mxu0 0
        %1248 = vmatpush1.bf16.xpose.msra.mxu0 0
        %1249 = vmatprep.subr.bf16.mxu0 0
        %1250 = vmatpush1.bf16.xpose.msra.mxu0 0
        %1251 = vmatprep.subr.bf16.mxu0 0
        %1252 = vmatpush1.bf16.xpose.msra.mxu0 0
        %1253 = vmatprep.subr.bf16.mxu0 0
        %1254 = vmatpush1.bf16.xpose.msra.mxu0 0
        %1255 = vmatprep.subr.bf16.mxu0 0
        %1256 = vmatpush1.bf16.xpose.msra.mxu0 0
        %1257 = vmatprep.subr.bf16.mxu0 0
        %1258 = vmatpush1.bf16.xpose.msra.mxu0 0
        %1259 = vmatprep.subr.bf16.mxu0 0
        %1260 = vmatpush1.bf16.xpose.msra.mxu0 0
        %1261 = vmatprep.subr.bf16.mxu0 0
        %1262 = vmatpush1.bf16.xpose.msra.mxu0 0
        %1263 = vmatprep.mubr.bf16.mxu0 0
        %1264 = vmatmul.mubr.bf16.gmra.mrb[0].mxu0 %v1226
        %v1265 = vpop.f32.mrb[0].mxu0
        %v1266 = vadd.f32 0.0, %v1265
        %v1267 = vpop.f32.mrb[0].mxu0
        %v1268 = vpop.f32.mrb[0].mxu0
        %v1269 = vadd.f32 0.0, %v1268
        %v1270 = vpop.f32.mrb[0].mxu0
        %1271 = vdwg.mxu0
        %v1272 = vsel %vm444, %v1266, -inf
        %1273 = vmax.xlane.f32.xlu0 %v1272
        %v1274 = vpop.xlane.xlu0 %1273
        %v1275 = vsel %vm444, %v1269, -inf
        %1276 = vmax.xlane.f32.xlu0 %v1275
        %v1277 = vpop.xlane.xlu0 %1276
        %v1278 = vsub.f32 %v1266, %v1274
        %v1279 = vsub.f32 %v1269, %v1277
        %v1280 = vmul.f32 %v1278, 1.442695
        %v1281 = vpow.pop %v1280
        %v1282 = vmul.f32 %v1279, 1.442695
        %v1283 = vpow.pop %v1282
        %v1284 = vsel %vm444, %v1281, 0.0
        %1285 = vadd.xlane.f32.xlu0 %v1284
        %v1286 = vpop.xlane.xlu0 %1285
        %v1287 = vsel %vm444, %v1283, 0.0
        %1288 = vadd.xlane.f32.xlu0 %v1287
        %v1289 = vpop.xlane.xlu0 %1288
        %v1290 = vpack.c.bf16 %v1283, %v1281
        %1292 = vrot.lane.b32.xlu0 %v1219, 80
        %v1293 = vpop.permute.xlu0 %1292
        %v1296 = vsel %vm444, %v1290, 0
        %1298 = vmatprep.subr.bf16.mxu0 0
        %1299 = vmatpush1.bf16.msra.mxu0 %v1293
        %1300 = vmatprep.subr.bf16.mxu0 0
        %1301 = vmatpush1.bf16.msra.mxu0 0
        %1302 = vmatprep.subr.bf16.mxu0 0
        %1303 = vmatpush1.bf16.msra.mxu0 0
        %1304 = vmatprep.subr.bf16.mxu0 0
        %1305 = vmatpush1.bf16.msra.mxu0 0
        %1306 = vmatprep.subr.bf16.mxu0 0
        %1307 = vmatpush1.bf16.msra.mxu0 0
        %1308 = vmatprep.subr.bf16.mxu0 0
        %1309 = vmatpush1.bf16.msra.mxu0 0
        %1310 = vmatprep.subr.bf16.mxu0 0
        %1311 = vmatpush1.bf16.msra.mxu0 0
        %1312 = vmatprep.subr.bf16.mxu0 0
        %1313 = vmatpush1.bf16.msra.mxu0 0
        %1314 = vmatprep.subr.bf16.mxu0 0
        %1315 = vmatpush1.bf16.msra.mxu0 0
        %1316 = vmatprep.subr.bf16.mxu0 0
        %1317 = vmatpush1.bf16.msra.mxu0 0
        %1318 = vmatprep.subr.bf16.mxu0 0
        %1319 = vmatpush1.bf16.msra.mxu0 0
        %1320 = vmatprep.subr.bf16.mxu0 0
        %1321 = vmatpush1.bf16.msra.mxu0 0
        %1322 = vmatprep.subr.bf16.mxu0 0
        %1323 = vmatpush1.bf16.msra.mxu0 0
        %1324 = vmatprep.subr.bf16.mxu0 0
        %1325 = vmatpush1.bf16.msra.mxu0 0
        %1326 = vmatprep.subr.bf16.mxu0 0
        %1327 = vmatpush1.bf16.msra.mxu0 0
        %1328 = vmatprep.subr.bf16.mxu0 0
        %1329 = vmatpush1.bf16.msra.mxu0 0
        %1330 = vmatprep.mubr.bf16.mxu0 0
        %1331 = vmatmul.mubr.bf16.gmra.mrb[0].mxu0 %v1296
        %v1332 = vpop.f32.mrb[0].mxu0
        %v1333 = vadd.f32 0.0, %v1332
        %v1334 = vpop.f32.mrb[0].mxu0
        %v1335 = vpop.f32.mrb[0].mxu0
        %v1336 = vadd.f32 0.0, %v1335
        %v1337 = vpop.f32.mrb[0].mxu0
        %1338 = vdwg.mxu0
        %v1339 = vrcp.pop %v1286
        %v1340 = vrcp.pop %v1289
        %v1341 = vmul.f32 %v1333, %v1339
        %v1342 = vmul.f32 %v1336, %v1340
        %1345 = vrot.lane.b32.xlu0 %v1341, 48
        %v1346 = vpop.permute.xlu0 %1345
        %1347 = vrot.lane.b32.xlu0 %v1342, 48
        %v1348 = vpop.permute.xlu0 %1347
        %vm1351 = vcmask 458112
        %1352 = vst.msk [vmem:[#allocation3] sm:$0xff] %vm1351, %v1346
        %1353 = vst.msk [vmem:[#allocation3 + $0x8] sm:$0xff] %vm1351, %v1348
        %v1354 = vld [vmem:[#allocation2] sm:$0xff]
        %v1355 = vld [vmem:[#allocation2 + $0x10] sm:$0xff]
        %v1356 = vpack.c.bf16 %v1355, %v1354
        %v1357 = vld [vmem:[#allocation2 + $0x8] sm:$0xff]
        %v1358 = vld [vmem:[#allocation2 + $0x18] sm:$0xff]
        %v1359 = vpack.c.bf16 %v1358, %v1357
        %1361 = vrot.lane.b32.xlu0 %v1356, 72
        %v1362 = vpop.permute.xlu0 %1361
        %1363 = vrot.lane.b32.xlu0 %v1356, 8
        %v1364 = vpop.permute.xlu0 %1363
        %v1366 = vsel %vm396, %v1362, 0
        %v1369 = vsel %vm396, %v1364, 0
        %1371 = vmatprep.subr.bf16.mxu0 0
        %1372 = vmatpush1.bf16.xpose.msra.mxu0 %v1369
        %1373 = vmatprep.subr.bf16.mxu0 0
        %1374 = vmatpush1.bf16.xpose.msra.mxu0 0
        %1375 = vmatprep.subr.bf16.mxu0 0
        %1376 = vmatpush1.bf16.xpose.msra.mxu0 0
        %1377 = vmatprep.subr.bf16.mxu0 0
        %1378 = vmatpush1.bf16.xpose.msra.mxu0 0
        %1379 = vmatprep.subr.bf16.mxu0 0
        %1380 = vmatpush1.bf16.xpose.msra.mxu0 0
        %1381 = vmatprep.subr.bf16.mxu0 0
        %1382 = vmatpush1.bf16.xpose.msra.mxu0 0
        %1383 = vmatprep.subr.bf16.mxu0 0
        %1384 = vmatpush1.bf16.xpose.msra.mxu0 0
        %1385 = vmatprep.subr.bf16.mxu0 0
        %1386 = vmatpush1.bf16.xpose.msra.mxu0 0
        %1387 = vmatprep.subr.bf16.mxu0 0
        %1388 = vmatpush1.bf16.xpose.msra.mxu0 0
        %1389 = vmatprep.subr.bf16.mxu0 0
        %1390 = vmatpush1.bf16.xpose.msra.mxu0 0
        %1391 = vmatprep.subr.bf16.mxu0 0
        %1392 = vmatpush1.bf16.xpose.msra.mxu0 0
        %1393 = vmatprep.subr.bf16.mxu0 0
        %1394 = vmatpush1.bf16.xpose.msra.mxu0 0
        %1395 = vmatprep.subr.bf16.mxu0 0
        %1396 = vmatpush1.bf16.xpose.msra.mxu0 0
        %1397 = vmatprep.subr.bf16.mxu0 0
        %1398 = vmatpush1.bf16.xpose.msra.mxu0 0
        %1399 = vmatprep.subr.bf16.mxu0 0
        %1400 = vmatpush1.bf16.xpose.msra.mxu0 0
        %1401 = vmatprep.subr.bf16.mxu0 0
        %1402 = vmatpush1.bf16.xpose.msra.mxu0 0
        %1403 = vmatprep.mubr.bf16.mxu0 0
        %1404 = vmatmul.mubr.bf16.gmra.mrb[0].mxu0 %v1366
        %v1405 = vpop.f32.mrb[0].mxu0
        %v1406 = vadd.f32 0.0, %v1405
        %v1407 = vpop.f32.mrb[0].mxu0
        %v1408 = vpop.f32.mrb[0].mxu0
        %v1409 = vadd.f32 0.0, %v1408
        %v1410 = vpop.f32.mrb[0].mxu0
        %1411 = vdwg.mxu0
        %v1412 = vsel %vm444, %v1406, -inf
        %1413 = vmax.xlane.f32.xlu0 %v1412
        %v1414 = vpop.xlane.xlu0 %1413
        %v1415 = vsel %vm444, %v1409, -inf
        %1416 = vmax.xlane.f32.xlu0 %v1415
        %v1417 = vpop.xlane.xlu0 %1416
        %v1418 = vsub.f32 %v1406, %v1414
        %v1419 = vsub.f32 %v1409, %v1417
        %v1420 = vmul.f32 %v1418, 1.442695
        %v1421 = vpow.pop %v1420
        %v1422 = vmul.f32 %v1419, 1.442695
        %v1423 = vpow.pop %v1422
        %v1424 = vsel %vm444, %v1421, 0.0
        %1425 = vadd.xlane.f32.xlu0 %v1424
        %v1426 = vpop.xlane.xlu0 %1425
        %v1427 = vsel %vm444, %v1423, 0.0
        %1428 = vadd.xlane.f32.xlu0 %v1427
        %v1429 = vpop.xlane.xlu0 %1428
        %v1430 = vpack.c.bf16 %v1423, %v1421
        %1432 = vrot.lane.b32.xlu0 %v1359, 72
        %v1433 = vpop.permute.xlu0 %1432
        %v1436 = vsel %vm444, %v1430, 0
        %1438 = vmatprep.subr.bf16.mxu0 0
        %1439 = vmatpush1.bf16.msra.mxu0 %v1433
        %1440 = vmatprep.subr.bf16.mxu0 0
        %1441 = vmatpush1.bf16.msra.mxu0 0
        %1442 = vmatprep.subr.bf16.mxu0 0
        %1443 = vmatpush1.bf16.msra.mxu0 0
        %1444 = vmatprep.subr.bf16.mxu0 0
        %1445 = vmatpush1.bf16.msra.mxu0 0
        %1446 = vmatprep.subr.bf16.mxu0 0
        %1447 = vmatpush1.bf16.msra.mxu0 0
        %1448 = vmatprep.subr.bf16.mxu0 0
        %1449 = vmatpush1.bf16.msra.mxu0 0
        %1450 = vmatprep.subr.bf16.mxu0 0
        %1451 = vmatpush1.bf16.msra.mxu0 0
        %1452 = vmatprep.subr.bf16.mxu0 0
        %1453 = vmatpush1.bf16.msra.mxu0 0
        %1454 = vmatprep.subr.bf16.mxu0 0
        %1455 = vmatpush1.bf16.msra.mxu0 0
        %1456 = vmatprep.subr.bf16.mxu0 0
        %1457 = vmatpush1.bf16.msra.mxu0 0
        %1458 = vmatprep.subr.bf16.mxu0 0
        %1459 = vmatpush1.bf16.msra.mxu0 0
        %1460 = vmatprep.subr.bf16.mxu0 0
        %1461 = vmatpush1.bf16.msra.mxu0 0
        %1462 = vmatprep.subr.bf16.mxu0 0
        %1463 = vmatpush1.bf16.msra.mxu0 0
        %1464 = vmatprep.subr.bf16.mxu0 0
        %1465 = vmatpush1.bf16.msra.mxu0 0
        %1466 = vmatprep.subr.bf16.mxu0 0
        %1467 = vmatpush1.bf16.msra.mxu0 0
        %1468 = vmatprep.subr.bf16.mxu0 0
        %1469 = vmatpush1.bf16.msra.mxu0 0
        %1470 = vmatprep.mubr.bf16.mxu0 0
        %1471 = vmatmul.mubr.bf16.gmra.mrb[0].mxu0 %v1436
        %v1472 = vpop.f32.mrb[0].mxu0
        %v1473 = vadd.f32 0.0, %v1472
        %v1474 = vpop.f32.mrb[0].mxu0
        %v1475 = vpop.f32.mrb[0].mxu0
        %v1476 = vadd.f32 0.0, %v1475
        %v1477 = vpop.f32.mrb[0].mxu0
        %1478 = vdwg.mxu0
        %v1479 = vrcp.pop %v1426
        %v1480 = vrcp.pop %v1429
        %v1481 = vmul.f32 %v1473, %v1479
        %v1482 = vmul.f32 %v1476, %v1480
        %1485 = vrot.lane.b32.xlu0 %v1481, 56
        %v1486 = vpop.permute.xlu0 %1485
        %1487 = vrot.lane.b32.xlu0 %v1482, 56
        %v1488 = vpop.permute.xlu0 %1487
        %vm1491 = vcmask 523712
        %1492 = vst.msk [vmem:[#allocation3] sm:$0xff] %vm1491, %v1486
        %1493 = vst.msk [vmem:[#allocation3 + $0x8] sm:$0xff] %vm1491, %v1488
        %v1494 = vld [vmem:[#allocation3] sm:$0xff]
        %v1495 = vld [vmem:[#allocation3 + $0x8] sm:$0xff]
        %v1496 = vpack.c.bf16 %v1495, %v1494
        %v1497 = vld [vmem:[#allocation9] sm:$0xf]
        %v1498 = vld [vmem:[#allocation9 + $0x4] sm:$0xf]
        %v1499 = vld [vmem:[#allocation9 + $0x8] sm:$0xf]
        %v1500 = vld [vmem:[#allocation9 + $0xc] sm:$0xf]
        %v1501 = vld [vmem:[#allocation9 + $0x10] sm:$0xf]
        %v1502 = vld [vmem:[#allocation9 + $0x14] sm:$0xf]
        %v1503 = vld [vmem:[#allocation9 + $0x18] sm:$0xf]
        %v1504 = vld [vmem:[#allocation9 + $0x1c] sm:$0xf]
        %v1505 = vld [vmem:[%s4] sm:$0x1]
        %v1507 = vlaneseq
        %v1508 = vshrl.u32 %v1507, 7
        %v1509 = vsub.s32 0, %v1508
        %v1510 = vrot.slane %v1505, %v1509
        %v1520 = vunpack.c.l.b16 %v1497
        %v1521 = vunpack.c.l.b16 %v1498
        %v1522 = vunpack.c.l.b16 %v1499
        %v1523 = vunpack.c.l.b16 %v1500
        %v1524 = vunpack.c.l.b16 %v1501
        %v1525 = vunpack.c.l.b16 %v1502
        %v1526 = vunpack.c.l.b16 %v1503
        %v1527 = vunpack.c.l.b16 %v1504
        %v1528 = vpack.c.b16 %v1521, %v1520
        %v1529 = vpack.c.b16 %v1523, %v1522
        %v1530 = vpack.c.b16 %v1525, %v1524
        %v1531 = vpack.c.b16 %v1527, %v1526
        %v1537 = vsel %vm336, %v1496, 0
        %1539 = vmatprep.subr.bf16.mxu0 0
        %1540 = vmatpush1.bf16.msra.mxu0 %v1528
        %1541 = vmatprep.subr.bf16.mxu0 0
        %1542 = vmatpush1.bf16.msra.mxu0 %v1529
        %1543 = vmatprep.subr.bf16.mxu0 0
        %1544 = vmatpush1.bf16.msra.mxu0 %v1530
        %1545 = vmatprep.subr.bf16.mxu0 0
        %1546 = vmatpush1.bf16.msra.mxu0 %v1531
        %1547 = vmatprep.subr.bf16.mxu0 0
        %1548 = vmatpush1.bf16.msra.mxu0 0
        %1549 = vmatprep.subr.bf16.mxu0 0
        %1550 = vmatpush1.bf16.msra.mxu0 0
        %1551 = vmatprep.subr.bf16.mxu0 0
        %1552 = vmatpush1.bf16.msra.mxu0 0
        %1553 = vmatprep.subr.bf16.mxu0 0
        %1554 = vmatpush1.bf16.msra.mxu0 0
        %1555 = vmatprep.subr.bf16.mxu0 0
        %1556 = vmatpush1.bf16.msra.mxu0 0
        %1557 = vmatprep.subr.bf16.mxu0 0
        %1558 = vmatpush1.bf16.msra.mxu0 0
        %1559 = vmatprep.subr.bf16.mxu0 0
        %1560 = vmatpush1.bf16.msra.mxu0 0
        %1561 = vmatprep.subr.bf16.mxu0 0
        %1562 = vmatpush1.bf16.msra.mxu0 0
        %1563 = vmatprep.subr.bf16.mxu0 0
        %1564 = vmatpush1.bf16.msra.mxu0 0
        %1565 = vmatprep.subr.bf16.mxu0 0
        %1566 = vmatpush1.bf16.msra.mxu0 0
        %1567 = vmatprep.subr.bf16.mxu0 0
        %1568 = vmatpush1.bf16.msra.mxu0 0
        %1569 = vmatprep.subr.bf16.mxu0 0
        %1570 = vmatpush1.bf16.msra.mxu0 0
        %1571 = vmatprep.mubr.bf16.mxu0 0
        %1572 = vmatmul.mubr.bf16.gmra.mrb[0].mxu0 %v1537
        %v1573 = vpop.f32.mrb[0].mxu0
        %v1574 = vadd.f32 %v1510, %v1573
        %v1575 = vpop.f32.mrb[0].mxu0
        %v1576 = vpop.f32.mrb[0].mxu0
        %v1577 = vadd.f32 %v1510, %v1576
        %v1578 = vpop.f32.mrb[0].mxu0
        %1579 = vdwg.mxu0
        %1580 = vst.msk [vmem:[%s271] sm:$0xff] %vm336, %v1574
        %1581 = vst.msk [vmem:[%s271 + $0x8] sm:$0xff] %vm336, %v1577
        %s1582 = sand.u32 %s141, 1
        %s1583 = scalar_lea.sflag [#allocation6], %s1582
        %s1584 = sand.u32 %s141, 1
        %s1585 = smul.addr %s1584, 16
        %s1586 = scalar_lea.vmem [#allocation10], %s1585
        // Predicated region
        $region53: #{tpu_custom_call.1} parent=39 // pred_check
          %p1587 = pneg %p151
        $region54: #{tpu_custom_call.1} parent=39 // pred_check_branch
          %1589 = sbr.rel (%p1587) target = $region56
        $region55: #{tpu_custom_call.1} parent=39 // pred_region
          %s1591 = ssub.s32 256, 256
          %1592 = vsyncadd %s1583, %s1591
          %s1593 = smul.addr %s23, 2
          %s1594 = smul.addr %s1593, 128
          %s1595 = scalar_lea.hbm %s5, %s1594
          %s1596 = sshll.u32 %s1586, 4
          %s1597 = int_to_ptr.vmem [resolvable:$true] %s1596
          %1602 = dma.vmem_to_hbm [thread:$0]  %s1597, 256, %s1595, %s1583, 128, 128, 8
        $region56: #{tpu_custom_call.1} parent=39 // pred_fallthru
          _
      $region40: #{tpu_custom_call.1} parent=5 // pred_fallthru
        _
      %p1603 = scmp.le.s32.totalorder 2, %s18
      // Predicated region
      $region57: #{tpu_custom_call.1} parent=5 // pred_check
        %p1604 = pneg %p1603
      $region58: #{tpu_custom_call.1} parent=5 // pred_check_branch
        %1606 = sbr.rel (%p1604) target = $region60
      $region59: #{tpu_custom_call.1} parent=5 // pred_region
        %s1607 = ssub.s32 %s18, 2
        // Predicated region
        $region61: #{tpu_custom_call.1} parent=59 // pred_check
          %p1608 = pneg %p157
        $region62: #{tpu_custom_call.1} parent=59 // pred_check_branch
          %1610 = sbr.rel (%p1608) target = $region64
        $region63: #{tpu_custom_call.1} parent=59 // pred_region
          %s1611 = sand.u32 %s142, 1
          %s1612 = scalar_lea.sflag [#allocation6], %s1611
          %s1613 = sand.u32 %s142, 1
          %s1614 = smul.addr %s1613, 16
          %s1615 = scalar_lea.vmem [#allocation10], %s1614
          %1616 = dma.done %s1612, 256
        $region64: #{tpu_custom_call.1} parent=59 // pred_fallthru
          _
      $region60: #{tpu_custom_call.1} parent=5 // pred_fallthru
        _
    $region6: #{tpu_custom_call.1} parent=1 // loop_footer
      %s22 = sadd.s32 1, %s18
    $region7: #{tpu_custom_call.1} parent=1 // loop_footer_branch
      %17 = sbr.rel target = $region3
    $region8: #{tpu_custom_call.1} parent=1 // loop_exit
      _
    %1617 = vsyncpa [#allocation5], 1
    %s1618 = scalar_lea.sflag [#allocation5], 1
    %1619 = vsyncpa %s1618, 1
    %1620 = vsyncpa [#allocation8], 1
    %1621 = vsyncpa [#allocation6], 1
    %s1622 = scalar_lea.sflag [#allocation6], 1
    %1623 = vsyncpa %s1622, 1

</llo_original>
